<compile_context>
chip_gen: v5e
topology: v5e:2x2
jax: 0.10.0
libtpu: 0.0.40
codegen_flags: <defaults>
</compile_context>

<pallas_src>
import functools

import jax
import jax.numpy as jnp
from jax.experimental import pallas as pl
from jax.experimental.pallas import tpu as pltpu

EPS = 1e-5

_COMPILER_PARAMS = pltpu.CompilerParams(
    # Independent tiles, no cross-step accumulation -> both axes parallel (v7x dual-TC).
    dimension_semantics=("parallel", "parallel"),
    # Explicit limit: > v5e's 16 MiB scoped default, < v7x's 64 MiB physical VMEM.
    vmem_limit_bytes=32 * 1024 * 1024,
)

_VMEM_TILE_BUDGET = 20 * 1024 * 1024   # double-buffered in+out activation tiles


def _pick_tile_n(n, bytes_per_point):
    """Largest lane-friendly tile along the point axis that divides n exactly and keeps
    the double-buffered activation working set inside the VMEM budget (v7x-safe)."""
    for t in (8192, 4096, 2048, 1024, 512, 256, 128):
        if n % t == 0 and t * bytes_per_point <= _VMEM_TILE_BUDGET:
            return t
    return n   # small N: one full-axis block (block == full dim is always legal)


def _conv_stats_kernel(h_ref, scale_ref, shift_ref, w_ref, *out_refs,
                       apply_bn_relu, write_y, n_valid, tile_n):
    """[optional folded BN(prev)+ReLU] -> 1x1 conv (f32 MXU) -> merged partial BN stats.

    Channels-first tiles: h_ref (1, C_in, tN), y (C_out, tN) with the point axis on lanes,
    so the main store is lane-dense.  The conv bias is omitted (it cancels exactly under
    training-mode BatchNorm).  Partial stats (sum, sum-of-squares) for the NEXT BN layer go
    into one small (C_out, 2) block -> a single extra output DMA per grid step.
    """
    h = h_ref[0].astype(jnp.float32)                                  # (C_in, tN) f32
    if apply_bn_relu:
        # Folded BN affine of the previous layer: one FMA + max on the VPU.
        h = jnp.maximum(h * scale_ref[...] + shift_ref[...], 0.0)

    # 1x1 Conv1d == matmul over channels; f32 operands, f32 accumulation on the MXU
    # (compute is free here -- the kernel is HBM-bound -- and it keeps full accuracy).
    y = jnp.dot(w_ref[...], h, preferred_element_type=jnp.float32)   # (C_out, tN) f32

    if write_y:
        y_ref, stats_ref = out_refs
        y_ref[0] = y.astype(y_ref.dtype)        # bf16 HBM storage of the activation
    else:
        (stats_ref,) = out_refs

    ys = y
    if n_valid is not None:
        # N was padded in the wrapper: exclude padded columns from the statistics.
        col = pl.program_id(1) * tile_n + jax.lax.broadcasted_iota(jnp.int32, y.shape, 1)
        ys = jnp.where(col < n_valid, y, 0.0)

    # Streaming BatchNorm statistics from the f32 accumulator (pre-rounding).
    stats_ref[0, 0, :, 0:1] = jnp.sum(ys, axis=1, keepdims=True)       # (C_out, 1)
    stats_ref[0, 0, :, 1:2] = jnp.sum(ys * ys, axis=1, keepdims=True)  # (C_out, 1)


def _fused_out_kernel(h_ref, scale_in_ref, shift_in_ref, w_ref,
                      scale_out_ref, shift_out_ref, o_ref):
    """Final sweep: BN2+ReLU -> conv3 (recomputed, y3 never hits HBM) -> BN3+ReLU."""
    h = jnp.maximum(h_ref[0].astype(jnp.float32) * scale_in_ref[...] + shift_in_ref[...], 0.0)
    y = jnp.dot(w_ref[...], h, preferred_element_type=jnp.float32)
    o_ref[0] = jnp.maximum(y * scale_out_ref[...] + shift_out_ref[...], 0.0).astype(o_ref.dtype)


def _conv_stats_pass(h, scale, shift, w, *, apply_bn_relu, n_valid, write_y):
    B, c_in, n_pad = h.shape
    c_out = w.shape[0]
    out_item = 2 if write_y else 0                       # bf16 activation output (or none)
    tn = _pick_tile_n(n_pad, 2 * (c_in * h.dtype.itemsize + c_out * out_item))
    nt = n_pad // tn

    kernel = functools.partial(_conv_stats_kernel, apply_bn_relu=apply_bn_relu,
                               write_y=write_y, n_valid=n_valid, tile_n=tn)

    out_specs = [pl.BlockSpec((1, 1, c_out, 2), lambda bi, ti: (bi, ti, 0, 0))]
    out_shape = [jax.ShapeDtypeStruct((B, nt, c_out, 2), jnp.float32)]
    if write_y:
        out_specs = [pl.BlockSpec((1, c_out, tn), lambda bi, ti: (bi, 0, ti))] + out_specs
        out_shape = [jax.ShapeDtypeStruct((B, c_out, n_pad), jnp.bfloat16)] + out_shape

    outs = pl.pallas_call(
        kernel,
        grid=(B, nt),
        in_specs=[
            pl.BlockSpec((1, c_in, tn), lambda bi, ti: (bi, 0, ti)),
            # Parameters: constant index_map -> DMA'd once, stay VMEM-resident.
            pl.BlockSpec((c_in, 1), lambda bi, ti: (0, 0)),      # folded BN scale (prev layer)
            pl.BlockSpec((c_in, 1), lambda bi, ti: (0, 0)),      # folded BN shift (prev layer)
            pl.BlockSpec((c_out, c_in), lambda bi, ti: (0, 0)),  # conv weight (out, in), f32
        ],
        out_specs=out_specs,
        out_shape=out_shape,
        compiler_params=_COMPILER_PARAMS,
    )(h, scale, shift, w)

    if write_y:
        return outs[0], outs[1]
    return outs[0]


def _fused_output_pass(h, scale_in, shift_in, w, scale_out, shift_out):
    B, c_in, n_pad = h.shape
    c_out = w.shape[0]
    tn = _pick_tile_n(n_pad, 2 * (c_in * h.dtype.itemsize + c_out * 4))   # f32 output
    nt = n_pad // tn
    return pl.pallas_call(
        _fused_out_kernel,
        grid=(B, nt),
        in_specs=[
            pl.BlockSpec((1, c_in, tn), lambda bi, ti: (bi, 0, ti)),
            pl.BlockSpec((c_in, 1), lambda bi, ti: (0, 0)),      # folded BN2 scale
            pl.BlockSpec((c_in, 1), lambda bi, ti: (0, 0)),      # folded BN2 shift
            pl.BlockSpec((c_out, c_in), lambda bi, ti: (0, 0)),  # conv3 weight
            pl.BlockSpec((c_out, 1), lambda bi, ti: (0, 0)),     # folded BN3 scale
            pl.BlockSpec((c_out, 1), lambda bi, ti: (0, 0)),     # folded BN3 shift
        ],
        out_specs=pl.BlockSpec((1, c_out, tn), lambda bi, ti: (bi, 0, ti)),
        out_shape=jax.ShapeDtypeStruct((B, c_out, n_pad), jnp.float32),
        compiler_params=_COMPILER_PARAMS,
    )(h, scale_in, shift_in, w, scale_out, shift_out)


def _bn_scale_shift(stats, gamma, beta, count):
    """Reduce per-tile partial stats to exact global (B*N) batch statistics and fold
    BatchNorm's normalize + affine into a single scale/shift pair (C, 1) each."""
    tot = jnp.sum(stats, axis=(0, 1))                          # (C, 2)
    mean = tot[:, 0] / count
    var = jnp.maximum(tot[:, 1] / count - mean * mean, 0.0)
    scale = gamma * jax.lax.rsqrt(var + EPS)
    shift = beta - mean * scale
    return scale[:, None], shift[:, None]


def pointnet_block(x, params):
    """x: (B, C_in, N) float32 -> (B, output_size, N) float32 (PyTorch NCW layout)."""
    # TODO(synk): BatchNorm running_mean/running_var buffer updates (a training-time side
    # effect) are not materialized; the forward output uses batch statistics, matching the
    # PyTorch module's training-mode forward.
    B, c_in, n = x.shape
    count = jnp.float32(B * n)

    # Pad large, non-128-multiple point counts so stores stay lane-dense and tiles bounded;
    # BN statistics mask the padded columns in-kernel and the output is sliced back.
    if n > 128 and n % 128 != 0:
        n_pad = -(-n // 128) * 128
        x = jnp.pad(x, ((0, 0), (0, 0), (0, n_pad - n)))
        n_valid = n
    else:
        n_pad, n_valid = n, None

    dummy = jnp.zeros((c_in, 1), jnp.float32)   # unused prologue params for layer 1

    # Layer 1: conv1 -> y1 (bf16 in HBM) + streamed BN1 partial stats.
    y1, st1 = _conv_stats_pass(x, dummy, dummy, params["w1"],
                               apply_bn_relu=False, n_valid=n_valid, write_y=True)
    sc1, sh1 = _bn_scale_shift(st1, params["g1"], params["be1"], count)

    # Layer 2: BN1+ReLU fused as the prologue of conv2 -> y2 (bf16) + BN2 stats.
    y2, st2 = _conv_stats_pass(y1, sc1, sh1, params["w2"],
                               apply_bn_relu=True, n_valid=n_valid, write_y=True)
    sc2, sh2 = _bn_scale_shift(st2, params["g2"], params["be2"], count)

    # Layer 3, stats sweep: BN2+ReLU+conv3 emitting only BN3 partial stats (y3 never
    # written to HBM -- the biggest structural bandwidth saving).
    st3 = _conv_stats_pass(y2, sc2, sh2, params["w3"],
                           apply_bn_relu=True, n_valid=n_valid, write_y=False)
    sc3, sh3 = _bn_scale_shift(st3, params["g3"], params["be3"], count)

    # Layer 3, output sweep: re-read y2, recompute BN2+ReLU+conv3 (compute is free,
    # HBM-bound), apply BN3+ReLU, emit (B, C_out, N) directly.
    out = _fused_output_pass(y2, sc2, sh2, params["w3"], sc3, sh3)
    return out[:, :, :n] if n_pad != n else out


def init_params(key, input_size, output_size):
    """Deterministic synthetic parameters matching the PyTorch module's shapes.
    Conv1d weight (out, in, 1) stored as (out, in); bias (out,); BN gamma=1, beta=0."""
    dims = [(input_size, 64), (64, 64), (64, output_size)]
    params = {}
    for i, (cin, cout) in enumerate(dims, start=1):
        key, kw, kb = jax.random.split(key, 3)
        bound = 1.0 / jnp.sqrt(jnp.float32(cin))
        params[f"w{i}"] = jax.random.uniform(kw, (cout, cin), jnp.float32, -bound, bound)
        params[f"b{i}"] = jax.random.uniform(kb, (cout,), jnp.float32, -bound, bound)
        params[f"g{i}"] = jnp.ones((cout,), jnp.float32)
        params[f"be{i}"] = jnp.zeros((cout,), jnp.float32)
    return params


def _reference_f32(x, params):
    """Pure-f32 reference of the PyTorch training-mode forward (conv bias included)."""
    h = x
    for i in (1, 2, 3):
        w, b = params[f"w{i}"], params[f"b{i}"]
        y = jnp.einsum("oc,bcn->bon", w, h) + b[None, :, None]
        mean = jnp.mean(y, axis=(0, 2), keepdims=True)
        var = jnp.mean((y - mean) ** 2, axis=(0, 2), keepdims=True)
        h = jnp.maximum((y - mean) * jax.lax.rsqrt(var + EPS)
                        * params[f"g{i}"][None, :, None]
                        + params[f"be{i}"][None, :, None], 0.0)
    return h


def _reference_storage_exact(x, params):
    """Mirrors the kernel's numerics exactly: f32 matmuls / f32 BN math, conv bias omitted
    (cancels under batch-stat BN), y1/y2 round-tripped through bf16 (their HBM storage
    format), BN stats taken from the pre-rounding f32 values."""
    h = x
    for i in (1, 2, 3):
        y = jnp.einsum("oc,bcn->bon", params[f"w{i}"], h)
        mean = jnp.mean(y, axis=(0, 2))
        var = jnp.maximum(jnp.mean(y * y, axis=(0, 2)) - mean * mean, 0.0)
        if i < 3:
            y = y.astype(jnp.bfloat16).astype(jnp.float32)   # bf16 HBM round-trip
        scale = params[f"g{i}"] * jax.lax.rsqrt(var + EPS)
        shift = params[f"be{i}"] - mean * scale
        h = jnp.maximum(y * scale[None, :, None] + shift[None, :, None], 0.0)
    return h


if __name__ == "__main__":
    key = jax.random.PRNGKey(0)
    k_params, k_x = jax.random.split(key)

    B, C_IN, N_POINTS, C_OUT = 2, 4, 16, 32
    params = init_params(k_params, C_IN, C_OUT)
    x = jax.random.normal(k_x, (B, C_IN, N_POINTS), jnp.float32)

    fwd = jax.jit(pointnet_block)
    out = jax.block_until_ready(fwd(x, params))
    assert out.shape == (B, C_OUT, N_POINTS)

    # Strict check: kernel vs a reference that models the exact same numerics
    # (f32 compute, bf16 storage of y1/y2) -> should agree to ~1e-5.
    ref_exact = _reference_storage_exact(x, params)
    err_exact = float(jnp.max(jnp.abs(out - ref_exact)))
    assert err_exact < 2e-3, f"storage-exact reference max abs err {err_exact}"

    # Fidelity check vs the all-f32 PyTorch-semantics forward: the only deviation is the
    # bf16 HBM storage of the two intermediate activations (documented perf trade-off).
    ref_f32 = _reference_f32(x, params)
    err_f32 = float(jnp.max(jnp.abs(out - ref_f32)))
    assert err_f32 < 5e-2, f"f32 reference max abs err {err_f32}"

    print("KERNEL_OK")
</pallas_src>

<mosaic_0001>
module attributes {stable_mosaic.version = 11 : i64} {
  func.func @_conv_stats_kernel(%arg0: i32, %arg1: i32, %arg2: memref<1x4x16xf32, #tpu.memory_space<vmem>>, %arg3: memref<4x1xf32, #tpu.memory_space<vmem>>, %arg4: memref<4x1xf32, #tpu.memory_space<vmem>>, %arg5: memref<64x4xf32, #tpu.memory_space<vmem>>, %arg6: memref<1x64x16xbf16, #tpu.memory_space<vmem>>, %arg7: memref<1x1x64x2xf32, #tpu.memory_space<vmem>>) attributes {dimension_semantics = [#tpu.dimension_semantics<parallel>, #tpu.dimension_semantics<parallel>], iteration_bounds = array<i64: 2, 1>, scalar_prefetch = 0 : i64, scratch_operands = 0 : i64, tpu.core_type = #tpu.core_type<tc>, window_params = [{transform_indices = @transform_0, window_bounds = array<i64: 1, 4, 16>}, {pipeline_mode = #tpu.pipeline_mode<synchronous>, transform_indices = @transform_1, window_bounds = array<i64: 4, 1>}, {pipeline_mode = #tpu.pipeline_mode<synchronous>, transform_indices = @transform_2, window_bounds = array<i64: 4, 1>}, {pipeline_mode = #tpu.pipeline_mode<synchronous>, transform_indices = @transform_3, window_bounds = array<i64: 64, 4>}, {transform_indices = @transform_4, window_bounds = array<i64: 1, 64, 16>}, {transform_indices = @transform_5, window_bounds = array<i64: 1, 1, 64, 2>}]} {
    %c0 = arith.constant 0 : index
    %c0_0 = arith.constant 0 : index
    %c0_1 = arith.constant 0 : index
    %0 = vector.load %arg2[%c0, %c0_0, %c0_1] : memref<1x4x16xf32, #tpu.memory_space<vmem>>, vector<1x4x16xf32>
    %1 = vector.shape_cast %0 : vector<1x4x16xf32> to vector<4x16xf32>
    %c0_2 = arith.constant 0 : index
    %c0_3 = arith.constant 0 : index
    %2 = vector.load %arg5[%c0_2, %c0_3] : memref<64x4xf32, #tpu.memory_space<vmem>>, vector<64x4xf32>
    %cst = arith.constant dense<0.000000e+00> : vector<64x16xf32>
    %3 = tpu.matmul %2, %1, %cst {dimension_numbers = #tpu.dot_dimension_numbers<[1], [0], [0], [1], [0, 0, 1, 1], [], []>} : vector<64x4xf32>, vector<4x16xf32>, vector<64x16xf32> -> vector<64x16xf32>
    %4 = arith.truncf %3 : vector<64x16xf32> to vector<64x16xbf16>
    %c0_4 = arith.constant 0 : index
    %c0_5 = arith.constant 0 : index
    %c0_6 = arith.constant 0 : index
    %5 = vector.load %arg6[%c0_4, %c0_5, %c0_6] : memref<1x64x16xbf16, #tpu.memory_space<vmem>>, vector<1x64x16xbf16>
    %6 = vector.shape_cast %5 : vector<1x64x16xbf16> to vector<64x16xbf16>
    %7 = vector.shape_cast %4 : vector<64x16xbf16> to vector<1x64x16xbf16>
    tpu.vector_store %arg6[%c0_4, %c0_5, %c0_6], %7 {strides = array<i32>} : memref<1x64x16xbf16, #tpu.memory_space<vmem>>, vector<1x64x16xbf16>,
    %cst_7 = arith.constant dense<0.000000e+00> : vector<64xf32>
    %8 = vector.multi_reduction <add>, %3, %cst_7 [1] : vector<64x16xf32> to vector<64xf32>
    %9 = vector.shape_cast %8 : vector<64xf32> to vector<64x1xf32>
    %c0_8 = arith.constant 0 : index
    %c0_9 = arith.constant 0 : index
    %c0_10 = arith.constant 0 : index
    %c0_11 = arith.constant 0 : index
    %10 = vector.load %arg7[%c0_8, %c0_9, %c0_10, %c0_11] : memref<1x1x64x2xf32, #tpu.memory_space<vmem>>, vector<1x1x64x1xf32>
    %11 = vector.shape_cast %10 : vector<1x1x64x1xf32> to vector<64x1xf32>
    %12 = vector.shape_cast %9 : vector<64x1xf32> to vector<1x1x64x1xf32>
    tpu.vector_store %arg7[%c0_8, %c0_9, %c0_10, %c0_11], %12 {strides = array<i32>} : memref<1x1x64x2xf32, #tpu.memory_space<vmem>>, vector<1x1x64x1xf32>,
    %13 = arith.mulf %3, %3 : vector<64x16xf32>
    %cst_12 = arith.constant dense<0.000000e+00> : vector<64xf32>
    %14 = vector.multi_reduction <add>, %13, %cst_12 [1] : vector<64x16xf32> to vector<64xf32>
    %15 = vector.shape_cast %14 : vector<64xf32> to vector<64x1xf32>
    %c0_13 = arith.constant 0 : index
    %c0_14 = arith.constant 0 : index
    %c0_15 = arith.constant 0 : index
    %c1 = arith.constant 1 : index
    %16 = vector.load %arg7[%c0_13, %c0_14, %c0_15, %c1] : memref<1x1x64x2xf32, #tpu.memory_space<vmem>>, vector<1x1x64x1xf32>
    %17 = vector.shape_cast %16 : vector<1x1x64x1xf32> to vector<64x1xf32>
    %18 = vector.shape_cast %15 : vector<64x1xf32> to vector<1x1x64x1xf32>
    tpu.vector_store %arg7[%c0_13, %c0_14, %c0_15, %c1], %18 {strides = array<i32>} : memref<1x1x64x2xf32, #tpu.memory_space<vmem>>, vector<1x1x64x1xf32>,
    return
  }
  func.func @transform_0(%arg0: i32, %arg1: i32) -> (i32, i32, i32) {
    %c0_i32 = arith.constant 0 : i32
    %c0_i32_0 = arith.constant 0 : i32
    return %arg0, %c0_i32, %arg1 : i32, i32, i32
  }
  func.func @transform_1(%arg0: i32, %arg1: i32) -> (i32, i32) {
    %c0_i32 = arith.constant 0 : i32
    %c0_i32_0 = arith.constant 0 : i32
    %c0_i32_1 = arith.constant 0 : i32
    return %c0_i32, %c0_i32_0 : i32, i32
  }
  func.func @transform_2(%arg0: i32, %arg1: i32) -> (i32, i32) {
    %c0_i32 = arith.constant 0 : i32
    %c0_i32_0 = arith.constant 0 : i32
    %c0_i32_1 = arith.constant 0 : i32
    return %c0_i32, %c0_i32_0 : i32, i32
  }
  func.func @transform_3(%arg0: i32, %arg1: i32) -> (i32, i32) {
    %c0_i32 = arith.constant 0 : i32
    %c0_i32_0 = arith.constant 0 : i32
    %c0_i32_1 = arith.constant 0 : i32
    return %c0_i32, %c0_i32_0 : i32, i32
  }
  func.func @transform_4(%arg0: i32, %arg1: i32) -> (i32, i32, i32) {
    %c0_i32 = arith.constant 0 : i32
    %c0_i32_0 = arith.constant 0 : i32
    return %arg0, %c0_i32, %arg1 : i32, i32, i32
  }
  func.func @transform_5(%arg0: i32, %arg1: i32) -> (i32, i32, i32, i32) {
    %c0_i32 = arith.constant 0 : i32
    %c0_i32_0 = arith.constant 0 : i32
    %c0_i32_1 = arith.constant 0 : i32
    return %arg0, %arg1, %c0_i32, %c0_i32_0 : i32, i32, i32, i32
  }
}

module attributes {stable_mosaic.version = 11 : i64} {
  func.func @_conv_stats_kernel(%arg0: i32, %arg1: i32, %arg2: memref<1x64x16xbf16, #tpu.memory_space<vmem>>, %arg3: memref<64x1xf32, #tpu.memory_space<vmem>>, %arg4: memref<64x1xf32, #tpu.memory_space<vmem>>, %arg5: memref<64x64xf32, #tpu.memory_space<vmem>>, %arg6: memref<1x64x16xbf16, #tpu.memory_space<vmem>>, %arg7: memref<1x1x64x2xf32, #tpu.memory_space<vmem>>) attributes {dimension_semantics = [#tpu.dimension_semantics<parallel>, #tpu.dimension_semantics<parallel>], iteration_bounds = array<i64: 2, 1>, scalar_prefetch = 0 : i64, scratch_operands = 0 : i64, tpu.core_type = #tpu.core_type<tc>, window_params = [{transform_indices = @transform_0, window_bounds = array<i64: 1, 64, 16>}, {pipeline_mode = #tpu.pipeline_mode<synchronous>, transform_indices = @transform_1, window_bounds = array<i64: 64, 1>}, {pipeline_mode = #tpu.pipeline_mode<synchronous>, transform_indices = @transform_2, window_bounds = array<i64: 64, 1>}, {pipeline_mode = #tpu.pipeline_mode<synchronous>, transform_indices = @transform_3, window_bounds = array<i64: 64, 64>}, {transform_indices = @transform_4, window_bounds = array<i64: 1, 64, 16>}, {transform_indices = @transform_5, window_bounds = array<i64: 1, 1, 64, 2>}]} {
    %c0 = arith.constant 0 : index
    %c0_0 = arith.constant 0 : index
    %c0_1 = arith.constant 0 : index
    %0 = vector.load %arg2[%c0, %c0_0, %c0_1] : memref<1x64x16xbf16, #tpu.memory_space<vmem>>, vector<1x64x16xbf16>
    %1 = vector.shape_cast %0 : vector<1x64x16xbf16> to vector<64x16xbf16>
    %2 = arith.extf %1 : vector<64x16xbf16> to vector<64x16xf32>
    %c0_2 = arith.constant 0 : index
    %c0_3 = arith.constant 0 : index
    %3 = vector.load %arg3[%c0_2, %c0_3] : memref<64x1xf32, #tpu.memory_space<vmem>>, vector<64x1xf32>
    %4 = vector.broadcast %3 : vector<64x1xf32> to vector<64x16xf32>
    %5 = arith.mulf %2, %4 : vector<64x16xf32>
    %c0_4 = arith.constant 0 : index
    %c0_5 = arith.constant 0 : index
    %6 = vector.load %arg4[%c0_4, %c0_5] : memref<64x1xf32, #tpu.memory_space<vmem>>, vector<64x1xf32>
    %7 = vector.broadcast %6 : vector<64x1xf32> to vector<64x16xf32>
    %8 = arith.addf %5, %7 : vector<64x16xf32>
    %cst = arith.constant 0.000000e+00 : f32
    %9 = vector.broadcast %cst : f32 to vector<64x16xf32>
    %10 = arith.maximumf %8, %9 : vector<64x16xf32>
    %c0_6 = arith.constant 0 : index
    %c0_7 = arith.constant 0 : index
    %11 = vector.load %arg5[%c0_6, %c0_7] : memref<64x64xf32, #tpu.memory_space<vmem>>, vector<64x64xf32>
    %cst_8 = arith.constant dense<0.000000e+00> : vector<64x16xf32>
    %12 = tpu.matmul %11, %10, %cst_8 {dimension_numbers = #tpu.dot_dimension_numbers<[1], [0], [0], [1], [0, 0, 1, 1], [], []>} : vector<64x64xf32>, vector<64x16xf32>, vector<64x16xf32> -> vector<64x16xf32>
    %13 = arith.truncf %12 : vector<64x16xf32> to vector<64x16xbf16>
    %c0_9 = arith.constant 0 : index
    %c0_10 = arith.constant 0 : index
    %c0_11 = arith.constant 0 : index
    %14 = vector.load %arg6[%c0_9, %c0_10, %c0_11] : memref<1x64x16xbf16, #tpu.memory_space<vmem>>, vector<1x64x16xbf16>
    %15 = vector.shape_cast %14 : vector<1x64x16xbf16> to vector<64x16xbf16>
    %16 = vector.shape_cast %13 : vector<64x16xbf16> to vector<1x64x16xbf16>
    tpu.vector_store %arg6[%c0_9, %c0_10, %c0_11], %16 {strides = array<i32>} : memref<1x64x16xbf16, #tpu.memory_space<vmem>>, vector<1x64x16xbf16>,
    %cst_12 = arith.constant dense<0.000000e+00> : vector<64xf32>
    %17 = vector.multi_reduction <add>, %12, %cst_12 [1] : vector<64x16xf32> to vector<64xf32>
    %18 = vector.shape_cast %17 : vector<64xf32> to vector<64x1xf32>
    %c0_13 = arith.constant 0 : index
    %c0_14 = arith.constant 0 : index
    %c0_15 = arith.constant 0 : index
    %c0_16 = arith.constant 0 : index
    %19 = vector.load %arg7[%c0_13, %c0_14, %c0_15, %c0_16] : memref<1x1x64x2xf32, #tpu.memory_space<vmem>>, vector<1x1x64x1xf32>
    %20 = vector.shape_cast %19 : vector<1x1x64x1xf32> to vector<64x1xf32>
    %21 = vector.shape_cast %18 : vector<64x1xf32> to vector<1x1x64x1xf32>
    tpu.vector_store %arg7[%c0_13, %c0_14, %c0_15, %c0_16], %21 {strides = array<i32>} : memref<1x1x64x2xf32, #tpu.memory_space<vmem>>, vector<1x1x64x1xf32>,
    %22 = arith.mulf %12, %12 : vector<64x16xf32>
    %cst_17 = arith.constant dense<0.000000e+00> : vector<64xf32>
    %23 = vector.multi_reduction <add>, %22, %cst_17 [1] : vector<64x16xf32> to vector<64xf32>
    %24 = vector.shape_cast %23 : vector<64xf32> to vector<64x1xf32>
    %c0_18 = arith.constant 0 : index
    %c0_19 = arith.constant 0 : index
    %c0_20 = arith.constant 0 : index
    %c1 = arith.constant 1 : index
    %25 = vector.load %arg7[%c0_18, %c0_19, %c0_20, %c1] : memref<1x1x64x2xf32, #tpu.memory_space<vmem>>, vector<1x1x64x1xf32>
    %26 = vector.shape_cast %25 : vector<1x1x64x1xf32> to vector<64x1xf32>
    %27 = vector.shape_cast %24 : vector<64x1xf32> to vector<1x1x64x1xf32>
    tpu.vector_store %arg7[%c0_18, %c0_19, %c0_20, %c1], %27 {strides = array<i32>} : memref<1x1x64x2xf32, #tpu.memory_space<vmem>>, vector<1x1x64x1xf32>,
    return
  }
  func.func @transform_0(%arg0: i32, %arg1: i32) -> (i32, i32, i32) {
    %c0_i32 = arith.constant 0 : i32
    %c0_i32_0 = arith.constant 0 : i32
    return %arg0, %c0_i32, %arg1 : i32, i32, i32
  }
  func.func @transform_1(%arg0: i32, %arg1: i32) -> (i32, i32) {
    %c0_i32 = arith.constant 0 : i32
    %c0_i32_0 = arith.constant 0 : i32
    %c0_i32_1 = arith.constant 0 : i32
    return %c0_i32, %c0_i32_0 : i32, i32
  }
  func.func @transform_2(%arg0: i32, %arg1: i32) -> (i32, i32) {
    %c0_i32 = arith.constant 0 : i32
    %c0_i32_0 = arith.constant 0 : i32
    %c0_i32_1 = arith.constant 0 : i32
    return %c0_i32, %c0_i32_0 : i32, i32
  }
  func.func @transform_3(%arg0: i32, %arg1: i32) -> (i32, i32) {
    %c0_i32 = arith.constant 0 : i32
    %c0_i32_0 = arith.constant 0 : i32
    %c0_i32_1 = arith.constant 0 : i32
    return %c0_i32, %c0_i32_0 : i32, i32
  }
  func.func @transform_4(%arg0: i32, %arg1: i32) -> (i32, i32, i32) {
    %c0_i32 = arith.constant 0 : i32
    %c0_i32_0 = arith.constant 0 : i32
    return %arg0, %c0_i32, %arg1 : i32, i32, i32
  }
  func.func @transform_5(%arg0: i32, %arg1: i32) -> (i32, i32, i32, i32) {
    %c0_i32 = arith.constant 0 : i32
    %c0_i32_0 = arith.constant 0 : i32
    %c0_i32_1 = arith.constant 0 : i32
    return %arg0, %arg1, %c0_i32, %c0_i32_0 : i32, i32, i32, i32
  }
}

module attributes {stable_mosaic.version = 11 : i64} {
  func.func @_conv_stats_kernel(%arg0: i32, %arg1: i32, %arg2: memref<1x64x16xbf16, #tpu.memory_space<vmem>>, %arg3: memref<64x1xf32, #tpu.memory_space<vmem>>, %arg4: memref<64x1xf32, #tpu.memory_space<vmem>>, %arg5: memref<32x64xf32, #tpu.memory_space<vmem>>, %arg6: memref<1x1x32x2xf32, #tpu.memory_space<vmem>>) attributes {dimension_semantics = [#tpu.dimension_semantics<parallel>, #tpu.dimension_semantics<parallel>], iteration_bounds = array<i64: 2, 1>, scalar_prefetch = 0 : i64, scratch_operands = 0 : i64, tpu.core_type = #tpu.core_type<tc>, window_params = [{transform_indices = @transform_0, window_bounds = array<i64: 1, 64, 16>}, {pipeline_mode = #tpu.pipeline_mode<synchronous>, transform_indices = @transform_1, window_bounds = array<i64: 64, 1>}, {pipeline_mode = #tpu.pipeline_mode<synchronous>, transform_indices = @transform_2, window_bounds = array<i64: 64, 1>}, {pipeline_mode = #tpu.pipeline_mode<synchronous>, transform_indices = @transform_3, window_bounds = array<i64: 32, 64>}, {transform_indices = @transform_4, window_bounds = array<i64: 1, 1, 32, 2>}]} {
    %c0 = arith.constant 0 : index
    %c0_0 = arith.constant 0 : index
    %c0_1 = arith.constant 0 : index
    %0 = vector.load %arg2[%c0, %c0_0, %c0_1] : memref<1x64x16xbf16, #tpu.memory_space<vmem>>, vector<1x64x16xbf16>
    %1 = vector.shape_cast %0 : vector<1x64x16xbf16> to vector<64x16xbf16>
    %2 = arith.extf %1 : vector<64x16xbf16> to vector<64x16xf32>
    %c0_2 = arith.constant 0 : index
    %c0_3 = arith.constant 0 : index
    %3 = vector.load %arg3[%c0_2, %c0_3] : memref<64x1xf32, #tpu.memory_space<vmem>>, vector<64x1xf32>
    %4 = vector.broadcast %3 : vector<64x1xf32> to vector<64x16xf32>
    %5 = arith.mulf %2, %4 : vector<64x16xf32>
    %c0_4 = arith.constant 0 : index
    %c0_5 = arith.constant 0 : index
    %6 = vector.load %arg4[%c0_4, %c0_5] : memref<64x1xf32, #tpu.memory_space<vmem>>, vector<64x1xf32>
    %7 = vector.broadcast %6 : vector<64x1xf32> to vector<64x16xf32>
    %8 = arith.addf %5, %7 : vector<64x16xf32>
    %cst = arith.constant 0.000000e+00 : f32
    %9 = vector.broadcast %cst : f32 to vector<64x16xf32>
    %10 = arith.maximumf %8, %9 : vector<64x16xf32>
    %c0_6 = arith.constant 0 : index
    %c0_7 = arith.constant 0 : index
    %11 = vector.load %arg5[%c0_6, %c0_7] : memref<32x64xf32, #tpu.memory_space<vmem>>, vector<32x64xf32>
    %cst_8 = arith.constant dense<0.000000e+00> : vector<32x16xf32>
    %12 = tpu.matmul %11, %10, %cst_8 {dimension_numbers = #tpu.dot_dimension_numbers<[1], [0], [0], [1], [0, 0, 1, 1], [], []>} : vector<32x64xf32>, vector<64x16xf32>, vector<32x16xf32> -> vector<32x16xf32>
    %cst_9 = arith.constant dense<0.000000e+00> : vector<32xf32>
    %13 = vector.multi_reduction <add>, %12, %cst_9 [1] : vector<32x16xf32> to vector<32xf32>
    %14 = vector.shape_cast %13 : vector<32xf32> to vector<32x1xf32>
    %c0_10 = arith.constant 0 : index
    %c0_11 = arith.constant 0 : index
    %c0_12 = arith.constant 0 : index
    %c0_13 = arith.constant 0 : index
    %15 = vector.load %arg6[%c0_10, %c0_11, %c0_12, %c0_13] : memref<1x1x32x2xf32, #tpu.memory_space<vmem>>, vector<1x1x32x1xf32>
    %16 = vector.shape_cast %15 : vector<1x1x32x1xf32> to vector<32x1xf32>
    %17 = vector.shape_cast %14 : vector<32x1xf32> to vector<1x1x32x1xf32>
    tpu.vector_store %arg6[%c0_10, %c0_11, %c0_12, %c0_13], %17 {strides = array<i32>} : memref<1x1x32x2xf32, #tpu.memory_space<vmem>>, vector<1x1x32x1xf32>,
    %18 = arith.mulf %12, %12 : vector<32x16xf32>
    %cst_14 = arith.constant dense<0.000000e+00> : vector<32xf32>
    %19 = vector.multi_reduction <add>, %18, %cst_14 [1] : vector<32x16xf32> to vector<32xf32>
    %20 = vector.shape_cast %19 : vector<32xf32> to vector<32x1xf32>
    %c0_15 = arith.constant 0 : index
    %c0_16 = arith.constant 0 : index
    %c0_17 = arith.constant 0 : index
    %c1 = arith.constant 1 : index
    %21 = vector.load %arg6[%c0_15, %c0_16, %c0_17, %c1] : memref<1x1x32x2xf32, #tpu.memory_space<vmem>>, vector<1x1x32x1xf32>
    %22 = vector.shape_cast %21 : vector<1x1x32x1xf32> to vector<32x1xf32>
    %23 = vector.shape_cast %20 : vector<32x1xf32> to vector<1x1x32x1xf32>
    tpu.vector_store %arg6[%c0_15, %c0_16, %c0_17, %c1], %23 {strides = array<i32>} : memref<1x1x32x2xf32, #tpu.memory_space<vmem>>, vector<1x1x32x1xf32>,
    return
  }
  func.func @transform_0(%arg0: i32, %arg1: i32) -> (i32, i32, i32) {
    %c0_i32 = arith.constant 0 : i32
    %c0_i32_0 = arith.constant 0 : i32
    return %arg0, %c0_i32, %arg1 : i32, i32, i32
  }
  func.func @transform_1(%arg0: i32, %arg1: i32) -> (i32, i32) {
    %c0_i32 = arith.constant 0 : i32
    %c0_i32_0 = arith.constant 0 : i32
    %c0_i32_1 = arith.constant 0 : i32
    return %c0_i32, %c0_i32_0 : i32, i32
  }
  func.func @transform_2(%arg0: i32, %arg1: i32) -> (i32, i32) {
    %c0_i32 = arith.constant 0 : i32
    %c0_i32_0 = arith.constant 0 : i32
    %c0_i32_1 = arith.constant 0 : i32
    return %c0_i32, %c0_i32_0 : i32, i32
  }
  func.func @transform_3(%arg0: i32, %arg1: i32) -> (i32, i32) {
    %c0_i32 = arith.constant 0 : i32
    %c0_i32_0 = arith.constant 0 : i32
    %c0_i32_1 = arith.constant 0 : i32
    return %c0_i32, %c0_i32_0 : i32, i32
  }
  func.func @transform_4(%arg0: i32, %arg1: i32) -> (i32, i32, i32, i32) {
    %c0_i32 = arith.constant 0 : i32
    %c0_i32_0 = arith.constant 0 : i32
    %c0_i32_1 = arith.constant 0 : i32
    return %arg0, %arg1, %c0_i32, %c0_i32_0 : i32, i32, i32, i32
  }
}

module attributes {stable_mosaic.version = 11 : i64} {
  func.func @_fused_out_kernel(%arg0: i32, %arg1: i32, %arg2: memref<1x64x16xbf16, #tpu.memory_space<vmem>>, %arg3: memref<64x1xf32, #tpu.memory_space<vmem>>, %arg4: memref<64x1xf32, #tpu.memory_space<vmem>>, %arg5: memref<32x64xf32, #tpu.memory_space<vmem>>, %arg6: memref<32x1xf32, #tpu.memory_space<vmem>>, %arg7: memref<32x1xf32, #tpu.memory_space<vmem>>, %arg8: memref<1x32x16xf32, #tpu.memory_space<vmem>>) attributes {dimension_semantics = [#tpu.dimension_semantics<parallel>, #tpu.dimension_semantics<parallel>], iteration_bounds = array<i64: 2, 1>, scalar_prefetch = 0 : i64, scratch_operands = 0 : i64, tpu.core_type = #tpu.core_type<tc>, window_params = [{transform_indices = @transform_0, window_bounds = array<i64: 1, 64, 16>}, {pipeline_mode = #tpu.pipeline_mode<synchronous>, transform_indices = @transform_1, window_bounds = array<i64: 64, 1>}, {pipeline_mode = #tpu.pipeline_mode<synchronous>, transform_indices = @transform_2, window_bounds = array<i64: 64, 1>}, {pipeline_mode = #tpu.pipeline_mode<synchronous>, transform_indices = @transform_3, window_bounds = array<i64: 32, 64>}, {pipeline_mode = #tpu.pipeline_mode<synchronous>, transform_indices = @transform_4, window_bounds = array<i64: 32, 1>}, {pipeline_mode = #tpu.pipeline_mode<synchronous>, transform_indices = @transform_5, window_bounds = array<i64: 32, 1>}, {transform_indices = @transform_6, window_bounds = array<i64: 1, 32, 16>}]} {
    %c0 = arith.constant 0 : index
    %c0_0 = arith.constant 0 : index
    %c0_1 = arith.constant 0 : index
    %0 = vector.load %arg2[%c0, %c0_0, %c0_1] : memref<1x64x16xbf16, #tpu.memory_space<vmem>>, vector<1x64x16xbf16>
    %1 = vector.shape_cast %0 : vector<1x64x16xbf16> to vector<64x16xbf16>
    %2 = arith.extf %1 : vector<64x16xbf16> to vector<64x16xf32>
    %c0_2 = arith.constant 0 : index
    %c0_3 = arith.constant 0 : index
    %3 = vector.load %arg3[%c0_2, %c0_3] : memref<64x1xf32, #tpu.memory_space<vmem>>, vector<64x1xf32>
    %4 = vector.broadcast %3 : vector<64x1xf32> to vector<64x16xf32>
    %5 = arith.mulf %2, %4 : vector<64x16xf32>
    %c0_4 = arith.constant 0 : index
    %c0_5 = arith.constant 0 : index
    %6 = vector.load %arg4[%c0_4, %c0_5] : memref<64x1xf32, #tpu.memory_space<vmem>>, vector<64x1xf32>
    %7 = vector.broadcast %6 : vector<64x1xf32> to vector<64x16xf32>
    %8 = arith.addf %5, %7 : vector<64x16xf32>
    %cst = arith.constant 0.000000e+00 : f32
    %9 = vector.broadcast %cst : f32 to vector<64x16xf32>
    %10 = arith.maximumf %8, %9 : vector<64x16xf32>
    %c0_6 = arith.constant 0 : index
    %c0_7 = arith.constant 0 : index
    %11 = vector.load %arg5[%c0_6, %c0_7] : memref<32x64xf32, #tpu.memory_space<vmem>>, vector<32x64xf32>
    %cst_8 = arith.constant dense<0.000000e+00> : vector<32x16xf32>
    %12 = tpu.matmul %11, %10, %cst_8 {dimension_numbers = #tpu.dot_dimension_numbers<[1], [0], [0], [1], [0, 0, 1, 1], [], []>} : vector<32x64xf32>, vector<64x16xf32>, vector<32x16xf32> -> vector<32x16xf32>
    %c0_9 = arith.constant 0 : index
    %c0_10 = arith.constant 0 : index
    %13 = vector.load %arg6[%c0_9, %c0_10] : memref<32x1xf32, #tpu.memory_space<vmem>>, vector<32x1xf32>
    %14 = vector.broadcast %13 : vector<32x1xf32> to vector<32x16xf32>
    %15 = arith.mulf %12, %14 : vector<32x16xf32>
    %c0_11 = arith.constant 0 : index
    %c0_12 = arith.constant 0 : index
    %16 = vector.load %arg7[%c0_11, %c0_12] : memref<32x1xf32, #tpu.memory_space<vmem>>, vector<32x1xf32>
    %17 = vector.broadcast %16 : vector<32x1xf32> to vector<32x16xf32>
    %18 = arith.addf %15, %17 : vector<32x16xf32>
    %cst_13 = arith.constant 0.000000e+00 : f32
    %19 = vector.broadcast %cst_13 : f32 to vector<32x16xf32>
    %20 = arith.maximumf %18, %19 : vector<32x16xf32>
    %c0_14 = arith.constant 0 : index
    %c0_15 = arith.constant 0 : index
    %c0_16 = arith.constant 0 : index
    %21 = vector.load %arg8[%c0_14, %c0_15, %c0_16] : memref<1x32x16xf32, #tpu.memory_space<vmem>>, vector<1x32x16xf32>
    %22 = vector.shape_cast %21 : vector<1x32x16xf32> to vector<32x16xf32>
    %23 = vector.shape_cast %20 : vector<32x16xf32> to vector<1x32x16xf32>
    tpu.vector_store %arg8[%c0_14, %c0_15, %c0_16], %23 {strides = array<i32>} : memref<1x32x16xf32, #tpu.memory_space<vmem>>, vector<1x32x16xf32>,
    return
  }
  func.func @transform_0(%arg0: i32, %arg1: i32) -> (i32, i32, i32) {
    %c0_i32 = arith.constant 0 : i32
    %c0_i32_0 = arith.constant 0 : i32
    return %arg0, %c0_i32, %arg1 : i32, i32, i32
  }
  func.func @transform_1(%arg0: i32, %arg1: i32) -> (i32, i32) {
    %c0_i32 = arith.constant 0 : i32
    %c0_i32_0 = arith.constant 0 : i32
    %c0_i32_1 = arith.constant 0 : i32
    return %c0_i32, %c0_i32_0 : i32, i32
  }
  func.func @transform_2(%arg0: i32, %arg1: i32) -> (i32, i32) {
    %c0_i32 = arith.constant 0 : i32
    %c0_i32_0 = arith.constant 0 : i32
    %c0_i32_1 = arith.constant 0 : i32
    return %c0_i32, %c0_i32_0 : i32, i32
  }
  func.func @transform_3(%arg0: i32, %arg1: i32) -> (i32, i32) {
    %c0_i32 = arith.constant 0 : i32
    %c0_i32_0 = arith.constant 0 : i32
    %c0_i32_1 = arith.constant 0 : i32
    return %c0_i32, %c0_i32_0 : i32, i32
  }
  func.func @transform_4(%arg0: i32, %arg1: i32) -> (i32, i32) {
    %c0_i32 = arith.constant 0 : i32
    %c0_i32_0 = arith.constant 0 : i32
    %c0_i32_1 = arith.constant 0 : i32
    return %c0_i32, %c0_i32_0 : i32, i32
  }
  func.func @transform_5(%arg0: i32, %arg1: i32) -> (i32, i32) {
    %c0_i32 = arith.constant 0 : i32
    %c0_i32_0 = arith.constant 0 : i32
    %c0_i32_1 = arith.constant 0 : i32
    return %c0_i32, %c0_i32_0 : i32, i32
  }
  func.func @transform_6(%arg0: i32, %arg1: i32) -> (i32, i32, i32) {
    %c0_i32 = arith.constant 0 : i32
    %c0_i32_0 = arith.constant 0 : i32
    return %arg0, %c0_i32, %arg1 : i32, i32, i32
  }
}

</mosaic_0001>

<llo_original>
// kernel: pointnet_block.4
$region0: #{pointnet_block.4}
  #allocation0 [shape = 'u32[]', space=smem, size = 0x4, offset = 0x4, fixed_abs, tag = 'smem constant byte address 0x4 - core index']
  #allocation1 [shape = 'u32[72,128]{1,0:T(1,128)}', space=vmem, size = 0x9000, scoped, tag = 'internal scratch']
  %s0 = inlined_call_operand.vmem [shape: f32[2,4,16], index: 0, kind: input, shape index: {}]
  %s1 = inlined_call_operand.vmem [shape: f32[4,1], index: 1, kind: input, shape index: {}, may-alias: {1,2}]
  %s2 = inlined_call_operand.vmem [shape: f32[4,1], index: 2, kind: input, shape index: {}, may-alias: {1,2}]
  %s3 = inlined_call_operand.vmem [shape: f32[64,4], index: 3, kind: input, shape index: {}]
  %s4 = inlined_call_operand.vmem [shape: bf16[2,64,16], index: 4, kind: output, shape index: {0}]
  %s5 = inlined_call_operand.vmem [shape: f32[2,1,64,2], index: 5, kind: output, shape index: {1}]
  %6 = xla_tuple %s4, %s5
  %s7 = sld [smem:[#allocation0]]
  $region57: #{pointnet_block.4} parent=0
    _
  %s9 = ssub.s32 1, %s7
  %s10 = scalar_select 0, %s9, %s7
  loop: start=0, step=1, limit=4
  $region2: #{pointnet_block.4} parent=0 // loop_pre_header
    _
  $region3: #{pointnet_block.4} parent=0 // loop_header
    %s12 = sphi 0, %s16
    %p13 = scmp.ge.s32.totalorder %s12, 4
    %s19 = sphi 0, %s31
    %s20 = sphi 0, %s27
    %s21 = sphi 0, %s19
    %s22 = sphi 0, %s20
    %s23 = sphi 0, %s21
    %s24 = sphi 0, %s22
    %s36 = sphi 0, %s38
    %s39 = sphi 0, %s36
    %s40 = sphi 0, %s39
    %s56 = sphi 0, %s40
    %s60 = sphi 0, %s60
    %s62 = sphi 0, %s60
    %s63 = sphi 0, %s62
    %s77 = sphi 0, %s63
    %s81 = sphi 0, %s81
    %s83 = sphi 0, %s81
    %s84 = sphi 0, %s83
    %s98 = sphi 0, %s84
    %s102 = sphi 0, %s102
    %s104 = sphi 0, %s102
    %s105 = sphi 0, %s104
    %s119 = sphi 0, %s105
    %s127 = sphi 0, %s129
    %s130 = sphi 0, %s127
    %s131 = sphi 0, %s130
    %s147 = sphi 0, %s131
    %s155 = sphi 0, %s157
    %s158 = sphi 0, %s155
    %s159 = sphi 0, %s158
    %s175 = sphi 0, %s159
  $region4: #{pointnet_block.4} parent=0 // loop_header_branch
    %15 = sbr.rel (%p13) target = $region8
  $region5: #{pointnet_block.4} parent=0 // loop_body
    %s17 = ssub.s32 %s12, 1
    %s18 = ssub.s32 %s12, 2
    %s25 = sadd.s32 1, %s20
    %p26 = scmp.ge.s32.totalorder %s25, 1
    %s27 = scalar_select %p26, 0, %s25
    %s28 = sadd.s32 1, %s19
    %s29 = scalar_select %p26, %s28, %s19
    %p30 = scmp.ge.s32.totalorder %s29, 2
    %s31 = scalar_select %p30, 0, %s29
    %s32 = ssub.s32 %s19, %s31
    %s33 = ssub.s32 %s20, %s27
    %s34 = sor.u32 %s32, %s33
    %p35 = scmp.eq.s32.totalorder %s34, 0
    %s37 = sadd.s32 %s36, 1
    %s38 = scalar_select %p35, %s36, %s37
    %p41 = pneg %p35
    %p42 = scmp.eq.s32.totalorder %s12, 1
    %p43 = por %p41, %p42
    %p44 = scmp.ne.s32.totalorder %s36, %s39
    %p45 = scmp.eq.s32.totalorder %s12, 0
    %p46 = por %p44, %p45
    %p47 = scmp.ne.s32.totalorder %s36, %s39
    %p48 = scmp.eq.s32.totalorder %s17, 1
    %p49 = por %p47, %p48
    %p50 = scmp.ne.s32.totalorder %s39, %s40
    %p51 = scmp.eq.s32.totalorder %s17, 0
    %p52 = por %p50, %p51
    %p53 = scmp.ne.s32.totalorder %s39, %s40
    %p54 = scmp.eq.s32.totalorder %s18, 1
    %p55 = por %p53, %p54
    %p57 = scmp.ne.s32.totalorder %s40, %s56
    %p58 = scmp.eq.s32.totalorder %s18, 0
    %p59 = por %p57, %p58
    %s61 = sadd.s32 %s60, 1
    %p64 = scmp.eq.s32.totalorder %s12, 1
    %p65 = scmp.ne.s32.totalorder %s60, %s62
    %p66 = scmp.eq.s32.totalorder %s12, 0
    %p67 = por %p65, %p66
    %p68 = scmp.ne.s32.totalorder %s60, %s62
    %p69 = scmp.eq.s32.totalorder %s17, 1
    %p70 = por %p68, %p69
    %p71 = scmp.ne.s32.totalorder %s62, %s63
    %p72 = scmp.eq.s32.totalorder %s17, 0
    %p73 = por %p71, %p72
    %p74 = scmp.ne.s32.totalorder %s62, %s63
    %p75 = scmp.eq.s32.totalorder %s18, 1
    %p76 = por %p74, %p75
    %p78 = scmp.ne.s32.totalorder %s63, %s77
    %p79 = scmp.eq.s32.totalorder %s18, 0
    %p80 = por %p78, %p79
    %s82 = sadd.s32 %s81, 1
    %p85 = scmp.eq.s32.totalorder %s12, 1
    %p86 = scmp.ne.s32.totalorder %s81, %s83
    %p87 = scmp.eq.s32.totalorder %s12, 0
    %p88 = por %p86, %p87
    %p89 = scmp.ne.s32.totalorder %s81, %s83
    %p90 = scmp.eq.s32.totalorder %s17, 1
    %p91 = por %p89, %p90
    %p92 = scmp.ne.s32.totalorder %s83, %s84
    %p93 = scmp.eq.s32.totalorder %s17, 0
    %p94 = por %p92, %p93
    %p95 = scmp.ne.s32.totalorder %s83, %s84
    %p96 = scmp.eq.s32.totalorder %s18, 1
    %p97 = por %p95, %p96
    %p99 = scmp.ne.s32.totalorder %s84, %s98
    %p100 = scmp.eq.s32.totalorder %s18, 0
    %p101 = por %p99, %p100
    %s103 = sadd.s32 %s102, 1
    %p106 = scmp.eq.s32.totalorder %s12, 1
    %p107 = scmp.ne.s32.totalorder %s102, %s104
    %p108 = scmp.eq.s32.totalorder %s12, 0
    %p109 = por %p107, %p108
    %p110 = scmp.ne.s32.totalorder %s102, %s104
    %p111 = scmp.eq.s32.totalorder %s17, 1
    %p112 = por %p110, %p111
    %p113 = scmp.ne.s32.totalorder %s104, %s105
    %p114 = scmp.eq.s32.totalorder %s17, 0
    %p115 = por %p113, %p114
    %p116 = scmp.ne.s32.totalorder %s104, %s105
    %p117 = scmp.eq.s32.totalorder %s18, 1
    %p118 = por %p116, %p117
    %p120 = scmp.ne.s32.totalorder %s105, %s119
    %p121 = scmp.eq.s32.totalorder %s18, 0
    %p122 = por %p120, %p121
    %s123 = ssub.s32 %s19, %s31
    %s124 = ssub.s32 %s20, %s27
    %s125 = sor.u32 %s123, %s124
    %p126 = scmp.eq.s32.totalorder %s125, 0
    %s128 = sadd.s32 %s127, 1
    %s129 = scalar_select %p126, %s127, %s128
    %p132 = pneg %p126
    %p133 = scmp.eq.s32.totalorder %s12, 1
    %p134 = por %p132, %p133
    %p135 = scmp.ne.s32.totalorder %s127, %s130
    %p136 = scmp.eq.s32.totalorder %s12, 0
    %p137 = por %p135, %p136
    %p138 = scmp.ne.s32.totalorder %s127, %s130
    %p139 = scmp.eq.s32.totalorder %s17, 1
    %p140 = por %p138, %p139
    %p141 = scmp.ne.s32.totalorder %s130, %s131
    %p142 = scmp.eq.s32.totalorder %s17, 0
    %p143 = por %p141, %p142
    %p144 = scmp.ne.s32.totalorder %s130, %s131
    %p145 = scmp.eq.s32.totalorder %s18, 1
    %p146 = por %p144, %p145
    %p148 = scmp.ne.s32.totalorder %s131, %s147
    %p149 = scmp.eq.s32.totalorder %s18, 0
    %p150 = por %p148, %p149
    %s151 = ssub.s32 %s19, %s31
    %s152 = ssub.s32 %s20, %s27
    %s153 = sor.u32 %s151, %s152
    %p154 = scmp.eq.s32.totalorder %s153, 0
    %s156 = sadd.s32 %s155, 1
    %s157 = scalar_select %p154, %s155, %s156
    %p160 = pneg %p154
    %p161 = scmp.eq.s32.totalorder %s12, 1
    %p162 = por %p160, %p161
    %p163 = scmp.ne.s32.totalorder %s155, %s158
    %p164 = scmp.eq.s32.totalorder %s12, 0
    %p165 = por %p163, %p164
    %p166 = scmp.ne.s32.totalorder %s155, %s158
    %p167 = scmp.eq.s32.totalorder %s17, 1
    %p168 = por %p166, %p167
    %p169 = scmp.ne.s32.totalorder %s158, %s159
    %p170 = scmp.eq.s32.totalorder %s17, 0
    %p171 = por %p169, %p170
    %p172 = scmp.ne.s32.totalorder %s158, %s159
    %p173 = scmp.eq.s32.totalorder %s18, 1
    %p174 = por %p172, %p173
    %p176 = scmp.ne.s32.totalorder %s159, %s175
    %p177 = scmp.eq.s32.totalorder %s18, 0
    %p178 = por %p176, %p177
    %p179 = scmp.le.s32.totalorder 1, %s12
    %p180 = scmp.lt.s32.totalorder %s12, 3
    %p181 = pnand %p179, %p180
    %p182 = pneg %p181
    // Predicated region
    $region9: #{pointnet_block.4} parent=5 // pred_check
      _
    $region10: #{pointnet_block.4} parent=5 // pred_check_branch
      %184 = sbr.rel (%p181) target = $region12
    $region11: #{pointnet_block.4} parent=5 // pred_region
      %s185 = ssub.s32 %s12, 1
      // Predicated region
      $region13: #{pointnet_block.4} parent=11 // pred_check
        %p186 = pneg %p73
      $region14: #{pointnet_block.4} parent=11 // pred_check_branch
        %188 = sbr.rel (%p186) target = $region16
      $region15: #{pointnet_block.4} parent=11 // pred_region
        _
      $region16: #{pointnet_block.4} parent=11 // pred_fallthru
        _
      // Predicated region
      $region17: #{pointnet_block.4} parent=11 // pred_check
        %p189 = pneg %p94
      $region18: #{pointnet_block.4} parent=11 // pred_check_branch
        %191 = sbr.rel (%p189) target = $region20
      $region19: #{pointnet_block.4} parent=11 // pred_region
        _
      $region20: #{pointnet_block.4} parent=11 // pred_fallthru
        _
      // Predicated region
      $region21: #{pointnet_block.4} parent=11 // pred_check
        %p192 = pneg %p115
      $region22: #{pointnet_block.4} parent=11 // pred_check_branch
        %194 = sbr.rel (%p192) target = $region24
      $region23: #{pointnet_block.4} parent=11 // pred_region
        _
      $region24: #{pointnet_block.4} parent=11 // pred_fallthru
        _
    $region12: #{pointnet_block.4} parent=5 // pred_fallthru
      _
    %p195 = scmp.lt.s32.totalorder %s12, 2
    // Predicated region
    $region25: #{pointnet_block.4} parent=5 // pred_check
      %p196 = pneg %p195
    $region26: #{pointnet_block.4} parent=5 // pred_check_branch
      %198 = sbr.rel (%p196) target = $region28
    $region27: #{pointnet_block.4} parent=5 // pred_region
      // Predicated region
      $region29: #{pointnet_block.4} parent=27 // pred_check
        %p199 = pneg %p46
      $region30: #{pointnet_block.4} parent=27 // pred_check_branch
        %201 = sbr.rel (%p199) target = $region32
      $region31: #{pointnet_block.4} parent=27 // pred_region
        %p202 = scmp.lt.s32.totalorder %s19, 1
        %s203 = scalar_select %p202, %s19, 1
        %p204 = scmp.lt.s32.totalorder %s20, 0
        %s205 = scalar_select %p204, %s20, 0
        %s206 = sadd.s32 %s205, %s203
        %s207 = smul.addr %s206, 4
        %s208 = scalar_lea.vmem %s0, %s207
      $region32: #{pointnet_block.4} parent=27 // pred_fallthru
        _
    $region28: #{pointnet_block.4} parent=5 // pred_fallthru
      _
    %p209 = scmp.le.s32.totalorder 1, %s12
    %p210 = scmp.lt.s32.totalorder %s12, 3
    %p211 = pnand %p209, %p210
    %p212 = pneg %p211
    // Predicated region
    $region33: #{pointnet_block.4} parent=5 // pred_check
      _
    $region34: #{pointnet_block.4} parent=5 // pred_check_branch
      %214 = sbr.rel (%p211) target = $region36
    $region35: #{pointnet_block.4} parent=5 // pred_region
      %s215 = ssub.s32 %s12, 1
      %p216 = scmp.lt.s32.totalorder %s21, 1
      %s217 = scalar_select %p216, %s21, 1
      %p218 = scmp.lt.s32.totalorder %s22, 0
      %s219 = scalar_select %p218, %s22, 0
      %s220 = sadd.s32 %s219, %s217
      %s221 = smul.addr %s220, 4
      %s222 = scalar_lea.vmem %s0, %s221
      %p223 = pneg %p52
      %p224 = pneg %p49
      %p225 = pneg %p73
      %p226 = pneg %p70
      %p227 = pneg %p94
      %p228 = pneg %p91
      %p229 = pneg %p115
      %p230 = pneg %p112
      %p231 = pneg %p143
      %p232 = pneg %p140
      %p233 = scmp.lt.s32.totalorder %s21, 1
      %s234 = scalar_select %p233, %s21, 1
      %p235 = scmp.lt.s32.totalorder %s22, 0
      %s236 = scalar_select %p235, %s22, 0
      %s237 = smul.addr %s234, 8
      %s238 = sadd.s32 %s236, %s237
      %s239 = smul.addr %s238, 4
      %s240 = scalar_lea.vmem %s4, %s239
      %p241 = pneg %p171
      %p242 = pneg %p168
      %p243 = scmp.lt.s32.totalorder %s21, 1
      %s244 = scalar_select %p243, %s21, 1
      %p245 = scmp.lt.s32.totalorder %s22, 0
      %s246 = scalar_select %p245, %s22, 0
      %s247 = smul.addr %s246, 8
      %s248 = smul.addr %s244, 8
      %s249 = sadd.s32 %s247, %s248
      %s250 = smul.addr %s249, 8
      %s251 = scalar_lea.vmem %s5, %s250
      %p252 = scmp.lt.s32.totalorder %s21, 1
      %s253 = scalar_select %p252, %s21, 1
      %p254 = scmp.lt.s32.totalorder %s22, 0
      %s255 = scalar_select %p254, %s22, 0
      %s256 = sadd.s32 %s255, %s253
      %s257 = smul.addr %s256, 4
      %s258 = scalar_lea.vmem %s0, %s257
      %p259 = scmp.lt.s32.totalorder %s21, 1
      %s260 = scalar_select %p259, %s21, 1
      %p261 = scmp.lt.s32.totalorder %s22, 0
      %s262 = scalar_select %p261, %s22, 0
      %s263 = smul.addr %s260, 8
      %s264 = sadd.s32 %s262, %s263
      %s265 = smul.addr %s264, 4
      %s266 = scalar_lea.vmem %s4, %s265
      %p267 = scmp.lt.s32.totalorder %s21, 1
      %s268 = scalar_select %p267, %s21, 1
      %p269 = scmp.lt.s32.totalorder %s22, 0
      %s270 = scalar_select %p269, %s22, 0
      %s271 = smul.addr %s270, 8
      %s272 = smul.addr %s268, 8
      %s273 = sadd.s32 %s271, %s272
      %s274 = smul.addr %s273, 8
      %s275 = scalar_lea.vmem %s5, %s274
      %v276 = vld [vmem:[%s258] sm:$0xf]
      %v277 = vld [vmem:[%s3] sm:$0xff]
      %v278 = vld [vmem:[%s3 + $0x8] sm:$0xff]
      %v279 = vld [vmem:[%s3 + $0x10] sm:$0xff]
      %v280 = vld [vmem:[%s3 + $0x18] sm:$0xff]
      %v281 = vld [vmem:[%s3 + $0x20] sm:$0xff]
      %v282 = vld [vmem:[%s3 + $0x28] sm:$0xff]
      %v283 = vld [vmem:[%s3 + $0x30] sm:$0xff]
      %v284 = vld [vmem:[%s3 + $0x38] sm:$0xff]
      %vm285 = vcmask 31744
      %v287 = vsel %vm285, %v277, 0
      %v290 = vsel %vm285, %v278, 0
      %v293 = vsel %vm285, %v279, 0
      %v296 = vsel %vm285, %v280, 0
      %v299 = vsel %vm285, %v281, 0
      %v302 = vsel %vm285, %v282, 0
      %v305 = vsel %vm285, %v283, 0
      %v308 = vsel %vm285, %v284, 0
      %vm310 = vcmask 1043456
      %v312 = vsel %vm310, %v276, 0
      %314 = vmatpush.msra.mxu0 0.0
      %315 = vmatpush.msra.mxu0 0.0
      %316 = vmatpush.msra.mxu0 0.0
      %317 = vmatpush.msra.mxu0 0.0
      %318 = vmatpush.msra.mxu0 0.0
      %319 = vmatpush.msra.mxu0 0.0
      %320 = vmatpush.msra.mxu0 0.0
      %321 = vmatpush.msra.mxu0 0.0
      %322 = vmatpush.msra.mxu0 0.0
      %323 = vmatpush.msra.mxu0 0.0
      %324 = vmatpush.msra.mxu0 0.0
      %325 = vmatpush.msra.mxu0 0.0
      %326 = vmatpush.msra.mxu0 0.0
      %327 = vmatpush.msra.mxu0 0.0
      %328 = vmatpush.msra.mxu0 0.0
      %329 = vmatpush.msra.mxu0 %v312
      %330 = vmatmul.f32.gmra.mxu0 %v287
      %v331 = vpop.f32.mrf.mxu0
      %v332 = vadd.f32 0.0, %v331
      %333 = vmatmul.f32.gmra.mxu0 %v290
      %v334 = vpop.f32.mrf.mxu0
      %v335 = vadd.f32 0.0, %v334
      %336 = vmatmul.f32.gmra.mxu0 %v293
      %v337 = vpop.f32.mrf.mxu0
      %v338 = vadd.f32 0.0, %v337
      %339 = vmatmul.f32.gmra.mxu0 %v296
      %v340 = vpop.f32.mrf.mxu0
      %v341 = vadd.f32 0.0, %v340
      %342 = vmatmul.f32.gmra.mxu0 %v299
      %v343 = vpop.f32.mrf.mxu0
      %v344 = vadd.f32 0.0, %v343
      %345 = vmatmul.f32.gmra.mxu0 %v302
      %v346 = vpop.f32.mrf.mxu0
      %v347 = vadd.f32 0.0, %v346
      %348 = vmatmul.f32.gmra.mxu0 %v305
      %v349 = vpop.f32.mrf.mxu0
      %v350 = vadd.f32 0.0, %v349
      %351 = vmatmul.f32.gmra.mxu0 %v308
      %v352 = vpop.f32.mrf.mxu0
      %v353 = vadd.f32 0.0, %v352
      %354 = vdwg.mxu0
      %v355 = vpack.c.bf16 %v332, %v332
      %v356 = vpack.c.bf16 %v335, %v335
      %v357 = vpack.c.bf16 %v338, %v338
      %v358 = vpack.c.bf16 %v341, %v341
      %v359 = vpack.c.bf16 %v344, %v344
      %v360 = vpack.c.bf16 %v347, %v347
      %v361 = vpack.c.bf16 %v350, %v350
      %v362 = vpack.c.bf16 %v353, %v353
      %vm363 = vcmask 125952
      %364 = vst.msk [vmem:[%s266] sm:$0xf] %vm363, %v355
      %365 = vst.msk [vmem:[%s266 + $0x4] sm:$0xf] %vm363, %v356
      %366 = vst.msk [vmem:[%s266 + $0x8] sm:$0xf] %vm363, %v357
      %367 = vst.msk [vmem:[%s266 + $0xc] sm:$0xf] %vm363, %v358
      %368 = vst.msk [vmem:[%s266 + $0x10] sm:$0xf] %vm363, %v359
      %369 = vst.msk [vmem:[%s266 + $0x14] sm:$0xf] %vm363, %v360
      %370 = vst.msk [vmem:[%s266 + $0x18] sm:$0xf] %vm363, %v361
      %371 = vst.msk [vmem:[%s266 + $0x1c] sm:$0xf] %vm363, %v362
      %vm372 = vcmask 130048
      %v373 = vsel %vm372, %v332, 0.0
      %374 = vadd.xlane.f32.xlu0 %v373
      %v375 = vpop.xlane.xlu0 %374
      %v376 = vsel %vm372, %v335, 0.0
      %377 = vadd.xlane.f32.xlu0 %v376
      %v378 = vpop.xlane.xlu0 %377
      %v379 = vsel %vm372, %v338, 0.0
      %380 = vadd.xlane.f32.xlu0 %v379
      %v381 = vpop.xlane.xlu0 %380
      %v382 = vsel %vm372, %v341, 0.0
      %383 = vadd.xlane.f32.xlu0 %v382
      %v384 = vpop.xlane.xlu0 %383
      %v385 = vsel %vm372, %v344, 0.0
      %386 = vadd.xlane.f32.xlu0 %v385
      %v387 = vpop.xlane.xlu0 %386
      %v388 = vsel %vm372, %v347, 0.0
      %389 = vadd.xlane.f32.xlu0 %v388
      %v390 = vpop.xlane.xlu0 %389
      %v391 = vsel %vm372, %v350, 0.0
      %392 = vadd.xlane.f32.xlu0 %v391
      %v393 = vpop.xlane.xlu0 %392
      %v394 = vsel %vm372, %v353, 0.0
      %395 = vadd.xlane.f32.xlu0 %v394
      %v396 = vpop.xlane.xlu0 %395
      %vm397 = vcmask 7168
      %398 = vst.msk [vmem:[%s275] sm:$0xff] %vm397, %v375
      %399 = vst.msk [vmem:[%s275 + $0x8] sm:$0xff] %vm397, %v378
      %400 = vst.msk [vmem:[%s275 + $0x10] sm:$0xff] %vm397, %v381
      %401 = vst.msk [vmem:[%s275 + $0x18] sm:$0xff] %vm397, %v384
      %402 = vst.msk [vmem:[%s275 + $0x20] sm:$0xff] %vm397, %v387
      %403 = vst.msk [vmem:[%s275 + $0x28] sm:$0xff] %vm397, %v390
      %404 = vst.msk [vmem:[%s275 + $0x30] sm:$0xff] %vm397, %v393
      %405 = vst.msk [vmem:[%s275 + $0x38] sm:$0xff] %vm397, %v396
      %v406 = vmul.f32 %v332, %v332
      %v407 = vmul.f32 %v335, %v335
      %v408 = vmul.f32 %v338, %v338
      %v409 = vmul.f32 %v341, %v341
      %v410 = vmul.f32 %v344, %v344
      %v411 = vmul.f32 %v347, %v347
      %v412 = vmul.f32 %v350, %v350
      %v413 = vmul.f32 %v353, %v353
      %v414 = vsel %vm372, %v406, 0.0
      %415 = vadd.xlane.f32.xlu0 %v414
      %v416 = vpop.xlane.xlu0 %415
      %v417 = vsel %vm372, %v407, 0.0
      %418 = vadd.xlane.f32.xlu0 %v417
      %v419 = vpop.xlane.xlu0 %418
      %v420 = vsel %vm372, %v408, 0.0
      %421 = vadd.xlane.f32.xlu0 %v420
      %v422 = vpop.xlane.xlu0 %421
      %v423 = vsel %vm372, %v409, 0.0
      %424 = vadd.xlane.f32.xlu0 %v423
      %v425 = vpop.xlane.xlu0 %424
      %v426 = vsel %vm372, %v410, 0.0
      %427 = vadd.xlane.f32.xlu0 %v426
      %v428 = vpop.xlane.xlu0 %427
      %v429 = vsel %vm372, %v411, 0.0
      %430 = vadd.xlane.f32.xlu0 %v429
      %v431 = vpop.xlane.xlu0 %430
      %v432 = vsel %vm372, %v412, 0.0
      %433 = vadd.xlane.f32.xlu0 %v432
      %v434 = vpop.xlane.xlu0 %433
      %v435 = vsel %vm372, %v413, 0.0
      %436 = vadd.xlane.f32.xlu0 %v435
      %v437 = vpop.xlane.xlu0 %436
      %vm438 = vcmask 15368
      %439 = vst.msk [vmem:[%s275] sm:$0xff] %vm438, %v416
      %440 = vst.msk [vmem:[%s275 + $0x8] sm:$0xff] %vm438, %v419
      %441 = vst.msk [vmem:[%s275 + $0x10] sm:$0xff] %vm438, %v422
      %442 = vst.msk [vmem:[%s275 + $0x18] sm:$0xff] %vm438, %v425
      %443 = vst.msk [vmem:[%s275 + $0x20] sm:$0xff] %vm438, %v428
      %444 = vst.msk [vmem:[%s275 + $0x28] sm:$0xff] %vm438, %v431
      %445 = vst.msk [vmem:[%s275 + $0x30] sm:$0xff] %vm438, %v434
      %446 = vst.msk [vmem:[%s275 + $0x38] sm:$0xff] %vm438, %v437
      %p447 = scmp.lt.s32.totalorder %s21, 1
      %s448 = scalar_select %p447, %s21, 1
      %p449 = scmp.lt.s32.totalorder %s22, 0
      %s450 = scalar_select %p449, %s22, 0
      %s451 = smul.addr %s448, 8
      %s452 = sadd.s32 %s450, %s451
      %s453 = smul.addr %s452, 4
      %s454 = scalar_lea.vmem %s4, %s453
      %p455 = scmp.lt.s32.totalorder %s21, 1
      %s456 = scalar_select %p455, %s21, 1
      %p457 = scmp.lt.s32.totalorder %s22, 0
      %s458 = scalar_select %p457, %s22, 0
      %s459 = smul.addr %s458, 8
      %s460 = smul.addr %s456, 8
      %s461 = sadd.s32 %s459, %s460
      %s462 = smul.addr %s461, 8
      %s463 = scalar_lea.vmem %s5, %s462
      // Predicated region
      $region37: #{pointnet_block.4} parent=35 // pred_check
        %p464 = pneg %p140
      $region38: #{pointnet_block.4} parent=35 // pred_check_branch
        %466 = sbr.rel (%p464) target = $region40
      $region39: #{pointnet_block.4} parent=35 // pred_region
        _
      $region40: #{pointnet_block.4} parent=35 // pred_fallthru
        _
      // Predicated region
      $region41: #{pointnet_block.4} parent=35 // pred_check
        %p467 = pneg %p168
      $region42: #{pointnet_block.4} parent=35 // pred_check_branch
        %469 = sbr.rel (%p467) target = $region44
      $region43: #{pointnet_block.4} parent=35 // pred_region
        _
      $region44: #{pointnet_block.4} parent=35 // pred_fallthru
        _
    $region36: #{pointnet_block.4} parent=5 // pred_fallthru
      _
    %p470 = scmp.le.s32.totalorder 2, %s12
    // Predicated region
    $region45: #{pointnet_block.4} parent=5 // pred_check
      %p471 = pneg %p470
    $region46: #{pointnet_block.4} parent=5 // pred_check_branch
      %473 = sbr.rel (%p471) target = $region48
    $region47: #{pointnet_block.4} parent=5 // pred_region
      %s474 = ssub.s32 %s12, 2
      // Predicated region
      $region49: #{pointnet_block.4} parent=47 // pred_check
        %p475 = pneg %p146
      $region50: #{pointnet_block.4} parent=47 // pred_check_branch
        %477 = sbr.rel (%p475) target = $region52
      $region51: #{pointnet_block.4} parent=47 // pred_region
        %p478 = scmp.lt.s32.totalorder %s23, 1
        %s479 = scalar_select %p478, %s23, 1
        %p480 = scmp.lt.s32.totalorder %s24, 0
        %s481 = scalar_select %p480, %s24, 0
        %s482 = smul.addr %s479, 8
        %s483 = sadd.s32 %s481, %s482
        %s484 = smul.addr %s483, 4
        %s485 = scalar_lea.vmem %s4, %s484
      $region52: #{pointnet_block.4} parent=47 // pred_fallthru
        _
      // Predicated region
      $region53: #{pointnet_block.4} parent=47 // pred_check
        %p486 = pneg %p174
      $region54: #{pointnet_block.4} parent=47 // pred_check_branch
        %488 = sbr.rel (%p486) target = $region56
      $region55: #{pointnet_block.4} parent=47 // pred_region
        %p489 = scmp.lt.s32.totalorder %s23, 1
        %s490 = scalar_select %p489, %s23, 1
        %p491 = scmp.lt.s32.totalorder %s24, 0
        %s492 = scalar_select %p491, %s24, 0
        %s493 = smul.addr %s492, 8
        %s494 = smul.addr %s490, 8
        %s495 = sadd.s32 %s493, %s494
        %s496 = smul.addr %s495, 8
        %s497 = scalar_lea.vmem %s5, %s496
      $region56: #{pointnet_block.4} parent=47 // pred_fallthru
        _
    $region48: #{pointnet_block.4} parent=5 // pred_fallthru
      _
  $region6: #{pointnet_block.4} parent=0 // loop_footer
    %s16 = sadd.s32 1, %s12
  $region7: #{pointnet_block.4} parent=0 // loop_footer_branch
    %11 = sbr.rel target = $region3
  $region8: #{pointnet_block.4} parent=0 // loop_exit
    _

// kernel: pointnet_block.5
$region0: #{pointnet_block.5}
  #allocation0 [shape = 'u32[]', space=smem, size = 0x4, offset = 0x4, fixed_abs, tag = 'smem constant byte address 0x4 - core index']
  #allocation1 [shape = 'u32[72,128]{1,0:T(1,128)}', space=vmem, size = 0x9000, scoped, tag = 'internal scratch']
  %s0 = inlined_call_operand.vmem [shape: bf16[2,64,16], index: 0, kind: input, shape index: {}]
  %s1 = inlined_call_operand.vmem [shape: f32[64,1], index: 1, kind: input, shape index: {}]
  %s2 = inlined_call_operand.vmem [shape: f32[64,1], index: 2, kind: input, shape index: {}]
  %s3 = inlined_call_operand.vmem [shape: f32[64,64], index: 3, kind: input, shape index: {}]
  %s4 = inlined_call_operand.vmem [shape: bf16[2,64,16], index: 4, kind: output, shape index: {0}]
  %s5 = inlined_call_operand.vmem [shape: f32[2,1,64,2], index: 5, kind: output, shape index: {1}]
  %6 = xla_tuple %s4, %s5
  %s7 = sld [smem:[#allocation0]]
  $region57: #{pointnet_block.5} parent=0
    _
  %s9 = ssub.s32 1, %s7
  %s10 = scalar_select 0, %s9, %s7
  loop: start=0, step=1, limit=4
  $region2: #{pointnet_block.5} parent=0 // loop_pre_header
    _
  $region3: #{pointnet_block.5} parent=0 // loop_header
    %s12 = sphi 0, %s16
    %p13 = scmp.ge.s32.totalorder %s12, 4
    %s19 = sphi 0, %s31
    %s20 = sphi 0, %s27
    %s21 = sphi 0, %s19
    %s22 = sphi 0, %s20
    %s23 = sphi 0, %s21
    %s24 = sphi 0, %s22
    %s36 = sphi 0, %s38
    %s39 = sphi 0, %s36
    %s40 = sphi 0, %s39
    %s56 = sphi 0, %s40
    %s60 = sphi 0, %s60
    %s62 = sphi 0, %s60
    %s63 = sphi 0, %s62
    %s77 = sphi 0, %s63
    %s81 = sphi 0, %s81
    %s83 = sphi 0, %s81
    %s84 = sphi 0, %s83
    %s98 = sphi 0, %s84
    %s102 = sphi 0, %s102
    %s104 = sphi 0, %s102
    %s105 = sphi 0, %s104
    %s119 = sphi 0, %s105
    %s127 = sphi 0, %s129
    %s130 = sphi 0, %s127
    %s131 = sphi 0, %s130
    %s147 = sphi 0, %s131
    %s155 = sphi 0, %s157
    %s158 = sphi 0, %s155
    %s159 = sphi 0, %s158
    %s175 = sphi 0, %s159
  $region4: #{pointnet_block.5} parent=0 // loop_header_branch
    %15 = sbr.rel (%p13) target = $region8
  $region5: #{pointnet_block.5} parent=0 // loop_body
    %s17 = ssub.s32 %s12, 1
    %s18 = ssub.s32 %s12, 2
    %s25 = sadd.s32 1, %s20
    %p26 = scmp.ge.s32.totalorder %s25, 1
    %s27 = scalar_select %p26, 0, %s25
    %s28 = sadd.s32 1, %s19
    %s29 = scalar_select %p26, %s28, %s19
    %p30 = scmp.ge.s32.totalorder %s29, 2
    %s31 = scalar_select %p30, 0, %s29
    %s32 = ssub.s32 %s19, %s31
    %s33 = ssub.s32 %s20, %s27
    %s34 = sor.u32 %s32, %s33
    %p35 = scmp.eq.s32.totalorder %s34, 0
    %s37 = sadd.s32 %s36, 1
    %s38 = scalar_select %p35, %s36, %s37
    %p41 = pneg %p35
    %p42 = scmp.eq.s32.totalorder %s12, 1
    %p43 = por %p41, %p42
    %p44 = scmp.ne.s32.totalorder %s36, %s39
    %p45 = scmp.eq.s32.totalorder %s12, 0
    %p46 = por %p44, %p45
    %p47 = scmp.ne.s32.totalorder %s36, %s39
    %p48 = scmp.eq.s32.totalorder %s17, 1
    %p49 = por %p47, %p48
    %p50 = scmp.ne.s32.totalorder %s39, %s40
    %p51 = scmp.eq.s32.totalorder %s17, 0
    %p52 = por %p50, %p51
    %p53 = scmp.ne.s32.totalorder %s39, %s40
    %p54 = scmp.eq.s32.totalorder %s18, 1
    %p55 = por %p53, %p54
    %p57 = scmp.ne.s32.totalorder %s40, %s56
    %p58 = scmp.eq.s32.totalorder %s18, 0
    %p59 = por %p57, %p58
    %s61 = sadd.s32 %s60, 1
    %p64 = scmp.eq.s32.totalorder %s12, 1
    %p65 = scmp.ne.s32.totalorder %s60, %s62
    %p66 = scmp.eq.s32.totalorder %s12, 0
    %p67 = por %p65, %p66
    %p68 = scmp.ne.s32.totalorder %s60, %s62
    %p69 = scmp.eq.s32.totalorder %s17, 1
    %p70 = por %p68, %p69
    %p71 = scmp.ne.s32.totalorder %s62, %s63
    %p72 = scmp.eq.s32.totalorder %s17, 0
    %p73 = por %p71, %p72
    %p74 = scmp.ne.s32.totalorder %s62, %s63
    %p75 = scmp.eq.s32.totalorder %s18, 1
    %p76 = por %p74, %p75
    %p78 = scmp.ne.s32.totalorder %s63, %s77
    %p79 = scmp.eq.s32.totalorder %s18, 0
    %p80 = por %p78, %p79
    %s82 = sadd.s32 %s81, 1
    %p85 = scmp.eq.s32.totalorder %s12, 1
    %p86 = scmp.ne.s32.totalorder %s81, %s83
    %p87 = scmp.eq.s32.totalorder %s12, 0
    %p88 = por %p86, %p87
    %p89 = scmp.ne.s32.totalorder %s81, %s83
    %p90 = scmp.eq.s32.totalorder %s17, 1
    %p91 = por %p89, %p90
    %p92 = scmp.ne.s32.totalorder %s83, %s84
    %p93 = scmp.eq.s32.totalorder %s17, 0
    %p94 = por %p92, %p93
    %p95 = scmp.ne.s32.totalorder %s83, %s84
    %p96 = scmp.eq.s32.totalorder %s18, 1
    %p97 = por %p95, %p96
    %p99 = scmp.ne.s32.totalorder %s84, %s98
    %p100 = scmp.eq.s32.totalorder %s18, 0
    %p101 = por %p99, %p100
    %s103 = sadd.s32 %s102, 1
    %p106 = scmp.eq.s32.totalorder %s12, 1
    %p107 = scmp.ne.s32.totalorder %s102, %s104
    %p108 = scmp.eq.s32.totalorder %s12, 0
    %p109 = por %p107, %p108
    %p110 = scmp.ne.s32.totalorder %s102, %s104
    %p111 = scmp.eq.s32.totalorder %s17, 1
    %p112 = por %p110, %p111
    %p113 = scmp.ne.s32.totalorder %s104, %s105
    %p114 = scmp.eq.s32.totalorder %s17, 0
    %p115 = por %p113, %p114
    %p116 = scmp.ne.s32.totalorder %s104, %s105
    %p117 = scmp.eq.s32.totalorder %s18, 1
    %p118 = por %p116, %p117
    %p120 = scmp.ne.s32.totalorder %s105, %s119
    %p121 = scmp.eq.s32.totalorder %s18, 0
    %p122 = por %p120, %p121
    %s123 = ssub.s32 %s19, %s31
    %s124 = ssub.s32 %s20, %s27
    %s125 = sor.u32 %s123, %s124
    %p126 = scmp.eq.s32.totalorder %s125, 0
    %s128 = sadd.s32 %s127, 1
    %s129 = scalar_select %p126, %s127, %s128
    %p132 = pneg %p126
    %p133 = scmp.eq.s32.totalorder %s12, 1
    %p134 = por %p132, %p133
    %p135 = scmp.ne.s32.totalorder %s127, %s130
    %p136 = scmp.eq.s32.totalorder %s12, 0
    %p137 = por %p135, %p136
    %p138 = scmp.ne.s32.totalorder %s127, %s130
    %p139 = scmp.eq.s32.totalorder %s17, 1
    %p140 = por %p138, %p139
    %p141 = scmp.ne.s32.totalorder %s130, %s131
    %p142 = scmp.eq.s32.totalorder %s17, 0
    %p143 = por %p141, %p142
    %p144 = scmp.ne.s32.totalorder %s130, %s131
    %p145 = scmp.eq.s32.totalorder %s18, 1
    %p146 = por %p144, %p145
    %p148 = scmp.ne.s32.totalorder %s131, %s147
    %p149 = scmp.eq.s32.totalorder %s18, 0
    %p150 = por %p148, %p149
    %s151 = ssub.s32 %s19, %s31
    %s152 = ssub.s32 %s20, %s27
    %s153 = sor.u32 %s151, %s152
    %p154 = scmp.eq.s32.totalorder %s153, 0
    %s156 = sadd.s32 %s155, 1
    %s157 = scalar_select %p154, %s155, %s156
    %p160 = pneg %p154
    %p161 = scmp.eq.s32.totalorder %s12, 1
    %p162 = por %p160, %p161
    %p163 = scmp.ne.s32.totalorder %s155, %s158
    %p164 = scmp.eq.s32.totalorder %s12, 0
    %p165 = por %p163, %p164
    %p166 = scmp.ne.s32.totalorder %s155, %s158
    %p167 = scmp.eq.s32.totalorder %s17, 1
    %p168 = por %p166, %p167
    %p169 = scmp.ne.s32.totalorder %s158, %s159
    %p170 = scmp.eq.s32.totalorder %s17, 0
    %p171 = por %p169, %p170
    %p172 = scmp.ne.s32.totalorder %s158, %s159
    %p173 = scmp.eq.s32.totalorder %s18, 1
    %p174 = por %p172, %p173
    %p176 = scmp.ne.s32.totalorder %s159, %s175
    %p177 = scmp.eq.s32.totalorder %s18, 0
    %p178 = por %p176, %p177
    %p179 = scmp.le.s32.totalorder 1, %s12
    %p180 = scmp.lt.s32.totalorder %s12, 3
    %p181 = pnand %p179, %p180
    %p182 = pneg %p181
    // Predicated region
    $region9: #{pointnet_block.5} parent=5 // pred_check
      _
    $region10: #{pointnet_block.5} parent=5 // pred_check_branch
      %184 = sbr.rel (%p181) target = $region12
    $region11: #{pointnet_block.5} parent=5 // pred_region
      %s185 = ssub.s32 %s12, 1
      // Predicated region
      $region13: #{pointnet_block.5} parent=11 // pred_check
        %p186 = pneg %p73
      $region14: #{pointnet_block.5} parent=11 // pred_check_branch
        %188 = sbr.rel (%p186) target = $region16
      $region15: #{pointnet_block.5} parent=11 // pred_region
        _
      $region16: #{pointnet_block.5} parent=11 // pred_fallthru
        _
      // Predicated region
      $region17: #{pointnet_block.5} parent=11 // pred_check
        %p189 = pneg %p94
      $region18: #{pointnet_block.5} parent=11 // pred_check_branch
        %191 = sbr.rel (%p189) target = $region20
      $region19: #{pointnet_block.5} parent=11 // pred_region
        _
      $region20: #{pointnet_block.5} parent=11 // pred_fallthru
        _
      // Predicated region
      $region21: #{pointnet_block.5} parent=11 // pred_check
        %p192 = pneg %p115
      $region22: #{pointnet_block.5} parent=11 // pred_check_branch
        %194 = sbr.rel (%p192) target = $region24
      $region23: #{pointnet_block.5} parent=11 // pred_region
        _
      $region24: #{pointnet_block.5} parent=11 // pred_fallthru
        _
    $region12: #{pointnet_block.5} parent=5 // pred_fallthru
      _
    %p195 = scmp.lt.s32.totalorder %s12, 2
    // Predicated region
    $region25: #{pointnet_block.5} parent=5 // pred_check
      %p196 = pneg %p195
    $region26: #{pointnet_block.5} parent=5 // pred_check_branch
      %198 = sbr.rel (%p196) target = $region28
    $region27: #{pointnet_block.5} parent=5 // pred_region
      // Predicated region
      $region29: #{pointnet_block.5} parent=27 // pred_check
        %p199 = pneg %p46
      $region30: #{pointnet_block.5} parent=27 // pred_check_branch
        %201 = sbr.rel (%p199) target = $region32
      $region31: #{pointnet_block.5} parent=27 // pred_region
        %p202 = scmp.lt.s32.totalorder %s19, 1
        %s203 = scalar_select %p202, %s19, 1
        %p204 = scmp.lt.s32.totalorder %s20, 0
        %s205 = scalar_select %p204, %s20, 0
        %s206 = smul.addr %s203, 8
        %s207 = sadd.s32 %s205, %s206
        %s208 = smul.addr %s207, 4
        %s209 = scalar_lea.vmem %s0, %s208
      $region32: #{pointnet_block.5} parent=27 // pred_fallthru
        _
    $region28: #{pointnet_block.5} parent=5 // pred_fallthru
      _
    %p210 = scmp.le.s32.totalorder 1, %s12
    %p211 = scmp.lt.s32.totalorder %s12, 3
    %p212 = pnand %p210, %p211
    %p213 = pneg %p212
    // Predicated region
    $region33: #{pointnet_block.5} parent=5 // pred_check
      _
    $region34: #{pointnet_block.5} parent=5 // pred_check_branch
      %215 = sbr.rel (%p212) target = $region36
    $region35: #{pointnet_block.5} parent=5 // pred_region
      %s216 = ssub.s32 %s12, 1
      %p217 = scmp.lt.s32.totalorder %s21, 1
      %s218 = scalar_select %p217, %s21, 1
      %p219 = scmp.lt.s32.totalorder %s22, 0
      %s220 = scalar_select %p219, %s22, 0
      %s221 = smul.addr %s218, 8
      %s222 = sadd.s32 %s220, %s221
      %s223 = smul.addr %s222, 4
      %s224 = scalar_lea.vmem %s0, %s223
      %p225 = pneg %p52
      %p226 = pneg %p49
      %p227 = pneg %p73
      %p228 = pneg %p70
      %p229 = pneg %p94
      %p230 = pneg %p91
      %p231 = pneg %p115
      %p232 = pneg %p112
      %p233 = pneg %p143
      %p234 = pneg %p140
      %p235 = scmp.lt.s32.totalorder %s21, 1
      %s236 = scalar_select %p235, %s21, 1
      %p237 = scmp.lt.s32.totalorder %s22, 0
      %s238 = scalar_select %p237, %s22, 0
      %s239 = smul.addr %s236, 8
      %s240 = sadd.s32 %s238, %s239
      %s241 = smul.addr %s240, 4
      %s242 = scalar_lea.vmem %s4, %s241
      %p243 = pneg %p171
      %p244 = pneg %p168
      %p245 = scmp.lt.s32.totalorder %s21, 1
      %s246 = scalar_select %p245, %s21, 1
      %p247 = scmp.lt.s32.totalorder %s22, 0
      %s248 = scalar_select %p247, %s22, 0
      %s249 = smul.addr %s248, 8
      %s250 = smul.addr %s246, 8
      %s251 = sadd.s32 %s249, %s250
      %s252 = smul.addr %s251, 8
      %s253 = scalar_lea.vmem %s5, %s252
      %p254 = scmp.lt.s32.totalorder %s21, 1
      %s255 = scalar_select %p254, %s21, 1
      %p256 = scmp.lt.s32.totalorder %s22, 0
      %s257 = scalar_select %p256, %s22, 0
      %s258 = smul.addr %s255, 8
      %s259 = sadd.s32 %s257, %s258
      %s260 = smul.addr %s259, 4
      %s261 = scalar_lea.vmem %s0, %s260
      %p262 = scmp.lt.s32.totalorder %s21, 1
      %s263 = scalar_select %p262, %s21, 1
      %p264 = scmp.lt.s32.totalorder %s22, 0
      %s265 = scalar_select %p264, %s22, 0
      %s266 = smul.addr %s263, 8
      %s267 = sadd.s32 %s265, %s266
      %s268 = smul.addr %s267, 4
      %s269 = scalar_lea.vmem %s4, %s268
      %p270 = scmp.lt.s32.totalorder %s21, 1
      %s271 = scalar_select %p270, %s21, 1
      %p272 = scmp.lt.s32.totalorder %s22, 0
      %s273 = scalar_select %p272, %s22, 0
      %s274 = smul.addr %s273, 8
      %s275 = smul.addr %s271, 8
      %s276 = sadd.s32 %s274, %s275
      %s277 = smul.addr %s276, 8
      %s278 = scalar_lea.vmem %s5, %s277
      %v279 = vld [vmem:[%s261] sm:$0xf]
      %v280 = vld [vmem:[%s261 + $0x4] sm:$0xf]
      %v281 = vld [vmem:[%s261 + $0x8] sm:$0xf]
      %v282 = vld [vmem:[%s261 + $0xc] sm:$0xf]
      %v283 = vld [vmem:[%s261 + $0x10] sm:$0xf]
      %v284 = vld [vmem:[%s261 + $0x14] sm:$0xf]
      %v285 = vld [vmem:[%s261 + $0x18] sm:$0xf]
      %v286 = vld [vmem:[%s261 + $0x1c] sm:$0xf]
      %v287 = vunpack.c.l.bf16 %v279
      %v288 = vunpack.c.l.bf16 %v280
      %v289 = vunpack.c.l.bf16 %v281
      %v290 = vunpack.c.l.bf16 %v282
      %v291 = vunpack.c.l.bf16 %v283
      %v292 = vunpack.c.l.bf16 %v284
      %v293 = vunpack.c.l.bf16 %v285
      %v294 = vunpack.c.l.bf16 %v286
      %v295 = vld [vmem:[%s1] sm:$0xff]
      %v296 = vld [vmem:[%s1 + $0x8] sm:$0xff]
      %v297 = vld [vmem:[%s1 + $0x10] sm:$0xff]
      %v298 = vld [vmem:[%s1 + $0x18] sm:$0xff]
      %v299 = vld [vmem:[%s1 + $0x20] sm:$0xff]
      %v300 = vld [vmem:[%s1 + $0x28] sm:$0xff]
      %v301 = vld [vmem:[%s1 + $0x30] sm:$0xff]
      %v302 = vld [vmem:[%s1 + $0x38] sm:$0xff]
      %304 = vset.pattern.permute.xlu0 0
      %305 = vperm.xlu0 %304, %v295
      %v306 = vpop.permute.xlu0 %305
      %309 = vset.pattern.permute.xlu0 0
      %310 = vperm.xlu0 %309, %v296
      %v311 = vpop.permute.xlu0 %310
      %314 = vset.pattern.permute.xlu0 0
      %315 = vperm.xlu0 %314, %v297
      %v316 = vpop.permute.xlu0 %315
      %319 = vset.pattern.permute.xlu0 0
      %320 = vperm.xlu0 %319, %v298
      %v321 = vpop.permute.xlu0 %320
      %324 = vset.pattern.permute.xlu0 0
      %325 = vperm.xlu0 %324, %v299
      %v326 = vpop.permute.xlu0 %325
      %329 = vset.pattern.permute.xlu0 0
      %330 = vperm.xlu0 %329, %v300
      %v331 = vpop.permute.xlu0 %330
      %334 = vset.pattern.permute.xlu0 0
      %335 = vperm.xlu0 %334, %v301
      %v336 = vpop.permute.xlu0 %335
      %339 = vset.pattern.permute.xlu0 0
      %340 = vperm.xlu0 %339, %v302
      %v341 = vpop.permute.xlu0 %340
      %v343 = vmul.f32 %v287, %v306
      %v344 = vmul.f32 %v288, %v311
      %v345 = vmul.f32 %v289, %v316
      %v346 = vmul.f32 %v290, %v321
      %v347 = vmul.f32 %v291, %v326
      %v348 = vmul.f32 %v292, %v331
      %v349 = vmul.f32 %v293, %v336
      %v350 = vmul.f32 %v294, %v341
      %v351 = vld [vmem:[%s2] sm:$0xff]
      %v352 = vld [vmem:[%s2 + $0x8] sm:$0xff]
      %v353 = vld [vmem:[%s2 + $0x10] sm:$0xff]
      %v354 = vld [vmem:[%s2 + $0x18] sm:$0xff]
      %v355 = vld [vmem:[%s2 + $0x20] sm:$0xff]
      %v356 = vld [vmem:[%s2 + $0x28] sm:$0xff]
      %v357 = vld [vmem:[%s2 + $0x30] sm:$0xff]
      %v358 = vld [vmem:[%s2 + $0x38] sm:$0xff]
      %360 = vset.pattern.permute.xlu0 0
      %361 = vperm.xlu0 %360, %v351
      %v362 = vpop.permute.xlu0 %361
      %365 = vset.pattern.permute.xlu0 0
      %366 = vperm.xlu0 %365, %v352
      %v367 = vpop.permute.xlu0 %366
      %370 = vset.pattern.permute.xlu0 0
      %371 = vperm.xlu0 %370, %v353
      %v372 = vpop.permute.xlu0 %371
      %375 = vset.pattern.permute.xlu0 0
      %376 = vperm.xlu0 %375, %v354
      %v377 = vpop.permute.xlu0 %376
      %380 = vset.pattern.permute.xlu0 0
      %381 = vperm.xlu0 %380, %v355
      %v382 = vpop.permute.xlu0 %381
      %385 = vset.pattern.permute.xlu0 0
      %386 = vperm.xlu0 %385, %v356
      %v387 = vpop.permute.xlu0 %386
      %390 = vset.pattern.permute.xlu0 0
      %391 = vperm.xlu0 %390, %v357
      %v392 = vpop.permute.xlu0 %391
      %395 = vset.pattern.permute.xlu0 0
      %396 = vperm.xlu0 %395, %v358
      %v397 = vpop.permute.xlu0 %396
      %v399 = vadd.f32 %v343, %v362
      %v400 = vadd.f32 %v344, %v367
      %v401 = vadd.f32 %v345, %v372
      %v402 = vadd.f32 %v346, %v377
      %v403 = vadd.f32 %v347, %v382
      %v404 = vadd.f32 %v348, %v387
      %v405 = vadd.f32 %v349, %v392
      %v406 = vadd.f32 %v350, %v397
      %v407 = vmax.f32 %v399, 0.0
      %v408 = vmax.f32 %v400, 0.0
      %v409 = vmax.f32 %v401, 0.0
      %v410 = vmax.f32 %v402, 0.0
      %v411 = vmax.f32 %v403, 0.0
      %v412 = vmax.f32 %v404, 0.0
      %v413 = vmax.f32 %v405, 0.0
      %v414 = vmax.f32 %v406, 0.0
      %v415 = vld [vmem:[%s3] sm:$0xff]
      %v416 = vld [vmem:[%s3 + $0x8] sm:$0xff]
      %v417 = vld [vmem:[%s3 + $0x10] sm:$0xff]
      %v418 = vld [vmem:[%s3 + $0x18] sm:$0xff]
      %v419 = vld [vmem:[%s3 + $0x20] sm:$0xff]
      %v420 = vld [vmem:[%s3 + $0x28] sm:$0xff]
      %v421 = vld [vmem:[%s3 + $0x30] sm:$0xff]
      %v422 = vld [vmem:[%s3 + $0x38] sm:$0xff]
      %vm423 = vcmask 523264
      %v425 = vsel %vm423, %v415, 0
      %v428 = vsel %vm423, %v416, 0
      %v431 = vsel %vm423, %v417, 0
      %v434 = vsel %vm423, %v418, 0
      %v437 = vsel %vm423, %v419, 0
      %v440 = vsel %vm423, %v420, 0
      %v443 = vsel %vm423, %v421, 0
      %v446 = vsel %vm423, %v422, 0
      %448 = vmatpush.msra.mxu0 0.0
      %449 = vmatpush.msra.mxu0 0.0
      %450 = vmatpush.msra.mxu0 0.0
      %451 = vmatpush.msra.mxu0 0.0
      %452 = vmatpush.msra.mxu0 0.0
      %453 = vmatpush.msra.mxu0 0.0
      %454 = vmatpush.msra.mxu0 0.0
      %455 = vmatpush.msra.mxu0 0.0
      %456 = vmatpush.msra.mxu0 %v414
      %457 = vmatpush.msra.mxu0 %v413
      %458 = vmatpush.msra.mxu0 %v412
      %459 = vmatpush.msra.mxu0 %v411
      %460 = vmatpush.msra.mxu0 %v410
      %461 = vmatpush.msra.mxu0 %v409
      %462 = vmatpush.msra.mxu0 %v408
      %463 = vmatpush.msra.mxu0 %v407
      %464 = vmatmul.f32.gmra.mxu0 %v425
      %v465 = vpop.f32.mrf.mxu0
      %v466 = vadd.f32 0.0, %v465
      %467 = vmatmul.f32.gmra.mxu0 %v428
      %v468 = vpop.f32.mrf.mxu0
      %v469 = vadd.f32 0.0, %v468
      %470 = vmatmul.f32.gmra.mxu0 %v431
      %v471 = vpop.f32.mrf.mxu0
      %v472 = vadd.f32 0.0, %v471
      %473 = vmatmul.f32.gmra.mxu0 %v434
      %v474 = vpop.f32.mrf.mxu0
      %v475 = vadd.f32 0.0, %v474
      %476 = vmatmul.f32.gmra.mxu0 %v437
      %v477 = vpop.f32.mrf.mxu0
      %v478 = vadd.f32 0.0, %v477
      %479 = vmatmul.f32.gmra.mxu0 %v440
      %v480 = vpop.f32.mrf.mxu0
      %v481 = vadd.f32 0.0, %v480
      %482 = vmatmul.f32.gmra.mxu0 %v443
      %v483 = vpop.f32.mrf.mxu0
      %v484 = vadd.f32 0.0, %v483
      %485 = vmatmul.f32.gmra.mxu0 %v446
      %v486 = vpop.f32.mrf.mxu0
      %v487 = vadd.f32 0.0, %v486
      %488 = vdwg.mxu0
      %v489 = vpack.c.bf16 %v466, %v466
      %v490 = vpack.c.bf16 %v469, %v469
      %v491 = vpack.c.bf16 %v472, %v472
      %v492 = vpack.c.bf16 %v475, %v475
      %v493 = vpack.c.bf16 %v478, %v478
      %v494 = vpack.c.bf16 %v481, %v481
      %v495 = vpack.c.bf16 %v484, %v484
      %v496 = vpack.c.bf16 %v487, %v487
      %vm497 = vcmask 125952
      %498 = vst.msk [vmem:[%s269] sm:$0xf] %vm497, %v489
      %499 = vst.msk [vmem:[%s269 + $0x4] sm:$0xf] %vm497, %v490
      %500 = vst.msk [vmem:[%s269 + $0x8] sm:$0xf] %vm497, %v491
      %501 = vst.msk [vmem:[%s269 + $0xc] sm:$0xf] %vm497, %v492
      %502 = vst.msk [vmem:[%s269 + $0x10] sm:$0xf] %vm497, %v493
      %503 = vst.msk [vmem:[%s269 + $0x14] sm:$0xf] %vm497, %v494
      %504 = vst.msk [vmem:[%s269 + $0x18] sm:$0xf] %vm497, %v495
      %505 = vst.msk [vmem:[%s269 + $0x1c] sm:$0xf] %vm497, %v496
      %vm506 = vcmask 130048
      %v507 = vsel %vm506, %v466, 0.0
      %508 = vadd.xlane.f32.xlu0 %v507
      %v509 = vpop.xlane.xlu0 %508
      %v510 = vsel %vm506, %v469, 0.0
      %511 = vadd.xlane.f32.xlu0 %v510
      %v512 = vpop.xlane.xlu0 %511
      %v513 = vsel %vm506, %v472, 0.0
      %514 = vadd.xlane.f32.xlu0 %v513
      %v515 = vpop.xlane.xlu0 %514
      %v516 = vsel %vm506, %v475, 0.0
      %517 = vadd.xlane.f32.xlu0 %v516
      %v518 = vpop.xlane.xlu0 %517
      %v519 = vsel %vm506, %v478, 0.0
      %520 = vadd.xlane.f32.xlu0 %v519
      %v521 = vpop.xlane.xlu0 %520
      %v522 = vsel %vm506, %v481, 0.0
      %523 = vadd.xlane.f32.xlu0 %v522
      %v524 = vpop.xlane.xlu0 %523
      %v525 = vsel %vm506, %v484, 0.0
      %526 = vadd.xlane.f32.xlu0 %v525
      %v527 = vpop.xlane.xlu0 %526
      %v528 = vsel %vm506, %v487, 0.0
      %529 = vadd.xlane.f32.xlu0 %v528
      %v530 = vpop.xlane.xlu0 %529
      %vm531 = vcmask 7168
      %532 = vst.msk [vmem:[%s278] sm:$0xff] %vm531, %v509
      %533 = vst.msk [vmem:[%s278 + $0x8] sm:$0xff] %vm531, %v512
      %534 = vst.msk [vmem:[%s278 + $0x10] sm:$0xff] %vm531, %v515
      %535 = vst.msk [vmem:[%s278 + $0x18] sm:$0xff] %vm531, %v518
      %536 = vst.msk [vmem:[%s278 + $0x20] sm:$0xff] %vm531, %v521
      %537 = vst.msk [vmem:[%s278 + $0x28] sm:$0xff] %vm531, %v524
      %538 = vst.msk [vmem:[%s278 + $0x30] sm:$0xff] %vm531, %v527
      %539 = vst.msk [vmem:[%s278 + $0x38] sm:$0xff] %vm531, %v530
      %v540 = vmul.f32 %v466, %v466
      %v541 = vmul.f32 %v469, %v469
      %v542 = vmul.f32 %v472, %v472
      %v543 = vmul.f32 %v475, %v475
      %v544 = vmul.f32 %v478, %v478
      %v545 = vmul.f32 %v481, %v481
      %v546 = vmul.f32 %v484, %v484
      %v547 = vmul.f32 %v487, %v487
      %v548 = vsel %vm506, %v540, 0.0
      %549 = vadd.xlane.f32.xlu0 %v548
      %v550 = vpop.xlane.xlu0 %549
      %v551 = vsel %vm506, %v541, 0.0
      %552 = vadd.xlane.f32.xlu0 %v551
      %v553 = vpop.xlane.xlu0 %552
      %v554 = vsel %vm506, %v542, 0.0
      %555 = vadd.xlane.f32.xlu0 %v554
      %v556 = vpop.xlane.xlu0 %555
      %v557 = vsel %vm506, %v543, 0.0
      %558 = vadd.xlane.f32.xlu0 %v557
      %v559 = vpop.xlane.xlu0 %558
      %v560 = vsel %vm506, %v544, 0.0
      %561 = vadd.xlane.f32.xlu0 %v560
      %v562 = vpop.xlane.xlu0 %561
      %v563 = vsel %vm506, %v545, 0.0
      %564 = vadd.xlane.f32.xlu0 %v563
      %v565 = vpop.xlane.xlu0 %564
      %v566 = vsel %vm506, %v546, 0.0
      %567 = vadd.xlane.f32.xlu0 %v566
      %v568 = vpop.xlane.xlu0 %567
      %v569 = vsel %vm506, %v547, 0.0
      %570 = vadd.xlane.f32.xlu0 %v569
      %v571 = vpop.xlane.xlu0 %570
      %vm572 = vcmask 15368
      %573 = vst.msk [vmem:[%s278] sm:$0xff] %vm572, %v550
      %574 = vst.msk [vmem:[%s278 + $0x8] sm:$0xff] %vm572, %v553
      %575 = vst.msk [vmem:[%s278 + $0x10] sm:$0xff] %vm572, %v556
      %576 = vst.msk [vmem:[%s278 + $0x18] sm:$0xff] %vm572, %v559
      %577 = vst.msk [vmem:[%s278 + $0x20] sm:$0xff] %vm572, %v562
      %578 = vst.msk [vmem:[%s278 + $0x28] sm:$0xff] %vm572, %v565
      %579 = vst.msk [vmem:[%s278 + $0x30] sm:$0xff] %vm572, %v568
      %580 = vst.msk [vmem:[%s278 + $0x38] sm:$0xff] %vm572, %v571
      %p581 = scmp.lt.s32.totalorder %s21, 1
      %s582 = scalar_select %p581, %s21, 1
      %p583 = scmp.lt.s32.totalorder %s22, 0
      %s584 = scalar_select %p583, %s22, 0
      %s585 = smul.addr %s582, 8
      %s586 = sadd.s32 %s584, %s585
      %s587 = smul.addr %s586, 4
      %s588 = scalar_lea.vmem %s4, %s587
      %p589 = scmp.lt.s32.totalorder %s21, 1
      %s590 = scalar_select %p589, %s21, 1
      %p591 = scmp.lt.s32.totalorder %s22, 0
      %s592 = scalar_select %p591, %s22, 0
      %s593 = smul.addr %s592, 8
      %s594 = smul.addr %s590, 8
      %s595 = sadd.s32 %s593, %s594
      %s596 = smul.addr %s595, 8
      %s597 = scalar_lea.vmem %s5, %s596
      // Predicated region
      $region37: #{pointnet_block.5} parent=35 // pred_check
        %p598 = pneg %p140
      $region38: #{pointnet_block.5} parent=35 // pred_check_branch
        %600 = sbr.rel (%p598) target = $region40
      $region39: #{pointnet_block.5} parent=35 // pred_region
        _
      $region40: #{pointnet_block.5} parent=35 // pred_fallthru
        _
      // Predicated region
      $region41: #{pointnet_block.5} parent=35 // pred_check
        %p601 = pneg %p168
      $region42: #{pointnet_block.5} parent=35 // pred_check_branch
        %603 = sbr.rel (%p601) target = $region44
      $region43: #{pointnet_block.5} parent=35 // pred_region
        _
      $region44: #{pointnet_block.5} parent=35 // pred_fallthru
        _
    $region36: #{pointnet_block.5} parent=5 // pred_fallthru
      _
    %p604 = scmp.le.s32.totalorder 2, %s12
    // Predicated region
    $region45: #{pointnet_block.5} parent=5 // pred_check
      %p605 = pneg %p604
    $region46: #{pointnet_block.5} parent=5 // pred_check_branch
      %607 = sbr.rel (%p605) target = $region48
    $region47: #{pointnet_block.5} parent=5 // pred_region
      %s608 = ssub.s32 %s12, 2
      // Predicated region
      $region49: #{pointnet_block.5} parent=47 // pred_check
        %p609 = pneg %p146
      $region50: #{pointnet_block.5} parent=47 // pred_check_branch
        %611 = sbr.rel (%p609) target = $region52
      $region51: #{pointnet_block.5} parent=47 // pred_region
        %p612 = scmp.lt.s32.totalorder %s23, 1
        %s613 = scalar_select %p612, %s23, 1
        %p614 = scmp.lt.s32.totalorder %s24, 0
        %s615 = scalar_select %p614, %s24, 0
        %s616 = smul.addr %s613, 8
        %s617 = sadd.s32 %s615, %s616
        %s618 = smul.addr %s617, 4
        %s619 = scalar_lea.vmem %s4, %s618
      $region52: #{pointnet_block.5} parent=47 // pred_fallthru
        _
      // Predicated region
      $region53: #{pointnet_block.5} parent=47 // pred_check
        %p620 = pneg %p174
      $region54: #{pointnet_block.5} parent=47 // pred_check_branch
        %622 = sbr.rel (%p620) target = $region56
      $region55: #{pointnet_block.5} parent=47 // pred_region
        %p623 = scmp.lt.s32.totalorder %s23, 1
        %s624 = scalar_select %p623, %s23, 1
        %p625 = scmp.lt.s32.totalorder %s24, 0
        %s626 = scalar_select %p625, %s24, 0
        %s627 = smul.addr %s626, 8
        %s628 = smul.addr %s624, 8
        %s629 = sadd.s32 %s627, %s628
        %s630 = smul.addr %s629, 8
        %s631 = scalar_lea.vmem %s5, %s630
      $region56: #{pointnet_block.5} parent=47 // pred_fallthru
        _
    $region48: #{pointnet_block.5} parent=5 // pred_fallthru
      _
  $region6: #{pointnet_block.5} parent=0 // loop_footer
    %s16 = sadd.s32 1, %s12
  $region7: #{pointnet_block.5} parent=0 // loop_footer_branch
    %11 = sbr.rel target = $region3
  $region8: #{pointnet_block.5} parent=0 // loop_exit
    _

// kernel: pointnet_block.6
$region0: #{pointnet_block.6}
  #allocation0 [shape = 'u32[]', space=smem, size = 0x4, offset = 0x4, fixed_abs, tag = 'smem constant byte address 0x4 - core index']
  #allocation1 [shape = 'u32[72,128]{1,0:T(1,128)}', space=vmem, size = 0x9000, scoped, tag = 'internal scratch']
  %s0 = inlined_call_operand.vmem [shape: bf16[2,64,16], index: 0, kind: input, shape index: {}]
  %s1 = inlined_call_operand.vmem [shape: f32[64,1], index: 1, kind: input, shape index: {}]
  %s2 = inlined_call_operand.vmem [shape: f32[64,1], index: 2, kind: input, shape index: {}]
  %s3 = inlined_call_operand.vmem [shape: f32[32,64], index: 3, kind: input, shape index: {}]
  %s4 = inlined_call_operand.vmem [shape: f32[2,1,32,2], index: 4, kind: output, shape index: {}]
  %s5 = sld [smem:[#allocation0]]
  $region49: #{pointnet_block.6} parent=0
    _
  %s7 = ssub.s32 1, %s5
  %s8 = scalar_select 0, %s7, %s5
  loop: start=0, step=1, limit=4
  $region2: #{pointnet_block.6} parent=0 // loop_pre_header
    _
  $region3: #{pointnet_block.6} parent=0 // loop_header
    %s10 = sphi 0, %s14
    %p11 = scmp.ge.s32.totalorder %s10, 4
    %s17 = sphi 0, %s29
    %s18 = sphi 0, %s25
    %s19 = sphi 0, %s17
    %s20 = sphi 0, %s18
    %s21 = sphi 0, %s19
    %s22 = sphi 0, %s20
    %s34 = sphi 0, %s36
    %s37 = sphi 0, %s34
    %s38 = sphi 0, %s37
    %s54 = sphi 0, %s38
    %s58 = sphi 0, %s58
    %s60 = sphi 0, %s58
    %s61 = sphi 0, %s60
    %s75 = sphi 0, %s61
    %s79 = sphi 0, %s79
    %s81 = sphi 0, %s79
    %s82 = sphi 0, %s81
    %s96 = sphi 0, %s82
    %s100 = sphi 0, %s100
    %s102 = sphi 0, %s100
    %s103 = sphi 0, %s102
    %s117 = sphi 0, %s103
    %s125 = sphi 0, %s127
    %s128 = sphi 0, %s125
    %s129 = sphi 0, %s128
    %s145 = sphi 0, %s129
  $region4: #{pointnet_block.6} parent=0 // loop_header_branch
    %13 = sbr.rel (%p11) target = $region8
  $region5: #{pointnet_block.6} parent=0 // loop_body
    %s15 = ssub.s32 %s10, 1
    %s16 = ssub.s32 %s10, 2
    %s23 = sadd.s32 1, %s18
    %p24 = scmp.ge.s32.totalorder %s23, 1
    %s25 = scalar_select %p24, 0, %s23
    %s26 = sadd.s32 1, %s17
    %s27 = scalar_select %p24, %s26, %s17
    %p28 = scmp.ge.s32.totalorder %s27, 2
    %s29 = scalar_select %p28, 0, %s27
    %s30 = ssub.s32 %s17, %s29
    %s31 = ssub.s32 %s18, %s25
    %s32 = sor.u32 %s30, %s31
    %p33 = scmp.eq.s32.totalorder %s32, 0
    %s35 = sadd.s32 %s34, 1
    %s36 = scalar_select %p33, %s34, %s35
    %p39 = pneg %p33
    %p40 = scmp.eq.s32.totalorder %s10, 1
    %p41 = por %p39, %p40
    %p42 = scmp.ne.s32.totalorder %s34, %s37
    %p43 = scmp.eq.s32.totalorder %s10, 0
    %p44 = por %p42, %p43
    %p45 = scmp.ne.s32.totalorder %s34, %s37
    %p46 = scmp.eq.s32.totalorder %s15, 1
    %p47 = por %p45, %p46
    %p48 = scmp.ne.s32.totalorder %s37, %s38
    %p49 = scmp.eq.s32.totalorder %s15, 0
    %p50 = por %p48, %p49
    %p51 = scmp.ne.s32.totalorder %s37, %s38
    %p52 = scmp.eq.s32.totalorder %s16, 1
    %p53 = por %p51, %p52
    %p55 = scmp.ne.s32.totalorder %s38, %s54
    %p56 = scmp.eq.s32.totalorder %s16, 0
    %p57 = por %p55, %p56
    %s59 = sadd.s32 %s58, 1
    %p62 = scmp.eq.s32.totalorder %s10, 1
    %p63 = scmp.ne.s32.totalorder %s58, %s60
    %p64 = scmp.eq.s32.totalorder %s10, 0
    %p65 = por %p63, %p64
    %p66 = scmp.ne.s32.totalorder %s58, %s60
    %p67 = scmp.eq.s32.totalorder %s15, 1
    %p68 = por %p66, %p67
    %p69 = scmp.ne.s32.totalorder %s60, %s61
    %p70 = scmp.eq.s32.totalorder %s15, 0
    %p71 = por %p69, %p70
    %p72 = scmp.ne.s32.totalorder %s60, %s61
    %p73 = scmp.eq.s32.totalorder %s16, 1
    %p74 = por %p72, %p73
    %p76 = scmp.ne.s32.totalorder %s61, %s75
    %p77 = scmp.eq.s32.totalorder %s16, 0
    %p78 = por %p76, %p77
    %s80 = sadd.s32 %s79, 1
    %p83 = scmp.eq.s32.totalorder %s10, 1
    %p84 = scmp.ne.s32.totalorder %s79, %s81
    %p85 = scmp.eq.s32.totalorder %s10, 0
    %p86 = por %p84, %p85
    %p87 = scmp.ne.s32.totalorder %s79, %s81
    %p88 = scmp.eq.s32.totalorder %s15, 1
    %p89 = por %p87, %p88
    %p90 = scmp.ne.s32.totalorder %s81, %s82
    %p91 = scmp.eq.s32.totalorder %s15, 0
    %p92 = por %p90, %p91
    %p93 = scmp.ne.s32.totalorder %s81, %s82
    %p94 = scmp.eq.s32.totalorder %s16, 1
    %p95 = por %p93, %p94
    %p97 = scmp.ne.s32.totalorder %s82, %s96
    %p98 = scmp.eq.s32.totalorder %s16, 0
    %p99 = por %p97, %p98
    %s101 = sadd.s32 %s100, 1
    %p104 = scmp.eq.s32.totalorder %s10, 1
    %p105 = scmp.ne.s32.totalorder %s100, %s102
    %p106 = scmp.eq.s32.totalorder %s10, 0
    %p107 = por %p105, %p106
    %p108 = scmp.ne.s32.totalorder %s100, %s102
    %p109 = scmp.eq.s32.totalorder %s15, 1
    %p110 = por %p108, %p109
    %p111 = scmp.ne.s32.totalorder %s102, %s103
    %p112 = scmp.eq.s32.totalorder %s15, 0
    %p113 = por %p111, %p112
    %p114 = scmp.ne.s32.totalorder %s102, %s103
    %p115 = scmp.eq.s32.totalorder %s16, 1
    %p116 = por %p114, %p115
    %p118 = scmp.ne.s32.totalorder %s103, %s117
    %p119 = scmp.eq.s32.totalorder %s16, 0
    %p120 = por %p118, %p119
    %s121 = ssub.s32 %s17, %s29
    %s122 = ssub.s32 %s18, %s25
    %s123 = sor.u32 %s121, %s122
    %p124 = scmp.eq.s32.totalorder %s123, 0
    %s126 = sadd.s32 %s125, 1
    %s127 = scalar_select %p124, %s125, %s126
    %p130 = pneg %p124
    %p131 = scmp.eq.s32.totalorder %s10, 1
    %p132 = por %p130, %p131
    %p133 = scmp.ne.s32.totalorder %s125, %s128
    %p134 = scmp.eq.s32.totalorder %s10, 0
    %p135 = por %p133, %p134
    %p136 = scmp.ne.s32.totalorder %s125, %s128
    %p137 = scmp.eq.s32.totalorder %s15, 1
    %p138 = por %p136, %p137
    %p139 = scmp.ne.s32.totalorder %s128, %s129
    %p140 = scmp.eq.s32.totalorder %s15, 0
    %p141 = por %p139, %p140
    %p142 = scmp.ne.s32.totalorder %s128, %s129
    %p143 = scmp.eq.s32.totalorder %s16, 1
    %p144 = por %p142, %p143
    %p146 = scmp.ne.s32.totalorder %s129, %s145
    %p147 = scmp.eq.s32.totalorder %s16, 0
    %p148 = por %p146, %p147
    %p149 = scmp.le.s32.totalorder 1, %s10
    %p150 = scmp.lt.s32.totalorder %s10, 3
    %p151 = pnand %p149, %p150
    %p152 = pneg %p151
    // Predicated region
    $region9: #{pointnet_block.6} parent=5 // pred_check
      _
    $region10: #{pointnet_block.6} parent=5 // pred_check_branch
      %154 = sbr.rel (%p151) target = $region12
    $region11: #{pointnet_block.6} parent=5 // pred_region
      %s155 = ssub.s32 %s10, 1
      // Predicated region
      $region13: #{pointnet_block.6} parent=11 // pred_check
        %p156 = pneg %p71
      $region14: #{pointnet_block.6} parent=11 // pred_check_branch
        %158 = sbr.rel (%p156) target = $region16
      $region15: #{pointnet_block.6} parent=11 // pred_region
        _
      $region16: #{pointnet_block.6} parent=11 // pred_fallthru
        _
      // Predicated region
      $region17: #{pointnet_block.6} parent=11 // pred_check
        %p159 = pneg %p92
      $region18: #{pointnet_block.6} parent=11 // pred_check_branch
        %161 = sbr.rel (%p159) target = $region20
      $region19: #{pointnet_block.6} parent=11 // pred_region
        _
      $region20: #{pointnet_block.6} parent=11 // pred_fallthru
        _
      // Predicated region
      $region21: #{pointnet_block.6} parent=11 // pred_check
        %p162 = pneg %p113
      $region22: #{pointnet_block.6} parent=11 // pred_check_branch
        %164 = sbr.rel (%p162) target = $region24
      $region23: #{pointnet_block.6} parent=11 // pred_region
        _
      $region24: #{pointnet_block.6} parent=11 // pred_fallthru
        _
    $region12: #{pointnet_block.6} parent=5 // pred_fallthru
      _
    %p165 = scmp.lt.s32.totalorder %s10, 2
    // Predicated region
    $region25: #{pointnet_block.6} parent=5 // pred_check
      %p166 = pneg %p165
    $region26: #{pointnet_block.6} parent=5 // pred_check_branch
      %168 = sbr.rel (%p166) target = $region28
    $region27: #{pointnet_block.6} parent=5 // pred_region
      // Predicated region
      $region29: #{pointnet_block.6} parent=27 // pred_check
        %p169 = pneg %p44
      $region30: #{pointnet_block.6} parent=27 // pred_check_branch
        %171 = sbr.rel (%p169) target = $region32
      $region31: #{pointnet_block.6} parent=27 // pred_region
        %p172 = scmp.lt.s32.totalorder %s17, 1
        %s173 = scalar_select %p172, %s17, 1
        %p174 = scmp.lt.s32.totalorder %s18, 0
        %s175 = scalar_select %p174, %s18, 0
        %s176 = smul.addr %s173, 8
        %s177 = sadd.s32 %s175, %s176
        %s178 = smul.addr %s177, 4
        %s179 = scalar_lea.vmem %s0, %s178
      $region32: #{pointnet_block.6} parent=27 // pred_fallthru
        _
    $region28: #{pointnet_block.6} parent=5 // pred_fallthru
      _
    %p180 = scmp.le.s32.totalorder 1, %s10
    %p181 = scmp.lt.s32.totalorder %s10, 3
    %p182 = pnand %p180, %p181
    %p183 = pneg %p182
    // Predicated region
    $region33: #{pointnet_block.6} parent=5 // pred_check
      _
    $region34: #{pointnet_block.6} parent=5 // pred_check_branch
      %185 = sbr.rel (%p182) target = $region36
    $region35: #{pointnet_block.6} parent=5 // pred_region
      %s186 = ssub.s32 %s10, 1
      %p187 = scmp.lt.s32.totalorder %s19, 1
      %s188 = scalar_select %p187, %s19, 1
      %p189 = scmp.lt.s32.totalorder %s20, 0
      %s190 = scalar_select %p189, %s20, 0
      %s191 = smul.addr %s188, 8
      %s192 = sadd.s32 %s190, %s191
      %s193 = smul.addr %s192, 4
      %s194 = scalar_lea.vmem %s0, %s193
      %p195 = pneg %p50
      %p196 = pneg %p47
      %p197 = pneg %p71
      %p198 = pneg %p68
      %p199 = pneg %p92
      %p200 = pneg %p89
      %p201 = pneg %p113
      %p202 = pneg %p110
      %p203 = pneg %p141
      %p204 = pneg %p138
      %p205 = scmp.lt.s32.totalorder %s19, 1
      %s206 = scalar_select %p205, %s19, 1
      %p207 = scmp.lt.s32.totalorder %s20, 0
      %s208 = scalar_select %p207, %s20, 0
      %s209 = smul.addr %s208, 4
      %s210 = smul.addr %s206, 4
      %s211 = sadd.s32 %s209, %s210
      %s212 = smul.addr %s211, 8
      %s213 = scalar_lea.vmem %s4, %s212
      %p214 = scmp.lt.s32.totalorder %s19, 1
      %s215 = scalar_select %p214, %s19, 1
      %p216 = scmp.lt.s32.totalorder %s20, 0
      %s217 = scalar_select %p216, %s20, 0
      %s218 = smul.addr %s215, 8
      %s219 = sadd.s32 %s217, %s218
      %s220 = smul.addr %s219, 4
      %s221 = scalar_lea.vmem %s0, %s220
      %p222 = scmp.lt.s32.totalorder %s19, 1
      %s223 = scalar_select %p222, %s19, 1
      %p224 = scmp.lt.s32.totalorder %s20, 0
      %s225 = scalar_select %p224, %s20, 0
      %s226 = smul.addr %s225, 4
      %s227 = smul.addr %s223, 4
      %s228 = sadd.s32 %s226, %s227
      %s229 = smul.addr %s228, 8
      %s230 = scalar_lea.vmem %s4, %s229
      %v231 = vld [vmem:[%s221] sm:$0xf]
      %v232 = vld [vmem:[%s221 + $0x4] sm:$0xf]
      %v233 = vld [vmem:[%s221 + $0x8] sm:$0xf]
      %v234 = vld [vmem:[%s221 + $0xc] sm:$0xf]
      %v235 = vld [vmem:[%s221 + $0x10] sm:$0xf]
      %v236 = vld [vmem:[%s221 + $0x14] sm:$0xf]
      %v237 = vld [vmem:[%s221 + $0x18] sm:$0xf]
      %v238 = vld [vmem:[%s221 + $0x1c] sm:$0xf]
      %v239 = vunpack.c.l.bf16 %v231
      %v240 = vunpack.c.l.bf16 %v232
      %v241 = vunpack.c.l.bf16 %v233
      %v242 = vunpack.c.l.bf16 %v234
      %v243 = vunpack.c.l.bf16 %v235
      %v244 = vunpack.c.l.bf16 %v236
      %v245 = vunpack.c.l.bf16 %v237
      %v246 = vunpack.c.l.bf16 %v238
      %v247 = vld [vmem:[%s1] sm:$0xff]
      %v248 = vld [vmem:[%s1 + $0x8] sm:$0xff]
      %v249 = vld [vmem:[%s1 + $0x10] sm:$0xff]
      %v250 = vld [vmem:[%s1 + $0x18] sm:$0xff]
      %v251 = vld [vmem:[%s1 + $0x20] sm:$0xff]
      %v252 = vld [vmem:[%s1 + $0x28] sm:$0xff]
      %v253 = vld [vmem:[%s1 + $0x30] sm:$0xff]
      %v254 = vld [vmem:[%s1 + $0x38] sm:$0xff]
      %256 = vset.pattern.permute.xlu0 0
      %257 = vperm.xlu0 %256, %v247
      %v258 = vpop.permute.xlu0 %257
      %261 = vset.pattern.permute.xlu0 0
      %262 = vperm.xlu0 %261, %v248
      %v263 = vpop.permute.xlu0 %262
      %266 = vset.pattern.permute.xlu0 0
      %267 = vperm.xlu0 %266, %v249
      %v268 = vpop.permute.xlu0 %267
      %271 = vset.pattern.permute.xlu0 0
      %272 = vperm.xlu0 %271, %v250
      %v273 = vpop.permute.xlu0 %272
      %276 = vset.pattern.permute.xlu0 0
      %277 = vperm.xlu0 %276, %v251
      %v278 = vpop.permute.xlu0 %277
      %281 = vset.pattern.permute.xlu0 0
      %282 = vperm.xlu0 %281, %v252
      %v283 = vpop.permute.xlu0 %282
      %286 = vset.pattern.permute.xlu0 0
      %287 = vperm.xlu0 %286, %v253
      %v288 = vpop.permute.xlu0 %287
      %291 = vset.pattern.permute.xlu0 0
      %292 = vperm.xlu0 %291, %v254
      %v293 = vpop.permute.xlu0 %292
      %v295 = vmul.f32 %v239, %v258
      %v296 = vmul.f32 %v240, %v263
      %v297 = vmul.f32 %v241, %v268
      %v298 = vmul.f32 %v242, %v273
      %v299 = vmul.f32 %v243, %v278
      %v300 = vmul.f32 %v244, %v283
      %v301 = vmul.f32 %v245, %v288
      %v302 = vmul.f32 %v246, %v293
      %v303 = vld [vmem:[%s2] sm:$0xff]
      %v304 = vld [vmem:[%s2 + $0x8] sm:$0xff]
      %v305 = vld [vmem:[%s2 + $0x10] sm:$0xff]
      %v306 = vld [vmem:[%s2 + $0x18] sm:$0xff]
      %v307 = vld [vmem:[%s2 + $0x20] sm:$0xff]
      %v308 = vld [vmem:[%s2 + $0x28] sm:$0xff]
      %v309 = vld [vmem:[%s2 + $0x30] sm:$0xff]
      %v310 = vld [vmem:[%s2 + $0x38] sm:$0xff]
      %312 = vset.pattern.permute.xlu0 0
      %313 = vperm.xlu0 %312, %v303
      %v314 = vpop.permute.xlu0 %313
      %317 = vset.pattern.permute.xlu0 0
      %318 = vperm.xlu0 %317, %v304
      %v319 = vpop.permute.xlu0 %318
      %322 = vset.pattern.permute.xlu0 0
      %323 = vperm.xlu0 %322, %v305
      %v324 = vpop.permute.xlu0 %323
      %327 = vset.pattern.permute.xlu0 0
      %328 = vperm.xlu0 %327, %v306
      %v329 = vpop.permute.xlu0 %328
      %332 = vset.pattern.permute.xlu0 0
      %333 = vperm.xlu0 %332, %v307
      %v334 = vpop.permute.xlu0 %333
      %337 = vset.pattern.permute.xlu0 0
      %338 = vperm.xlu0 %337, %v308
      %v339 = vpop.permute.xlu0 %338
      %342 = vset.pattern.permute.xlu0 0
      %343 = vperm.xlu0 %342, %v309
      %v344 = vpop.permute.xlu0 %343
      %347 = vset.pattern.permute.xlu0 0
      %348 = vperm.xlu0 %347, %v310
      %v349 = vpop.permute.xlu0 %348
      %v351 = vadd.f32 %v295, %v314
      %v352 = vadd.f32 %v296, %v319
      %v353 = vadd.f32 %v297, %v324
      %v354 = vadd.f32 %v298, %v329
      %v355 = vadd.f32 %v299, %v334
      %v356 = vadd.f32 %v300, %v339
      %v357 = vadd.f32 %v301, %v344
      %v358 = vadd.f32 %v302, %v349
      %v359 = vmax.f32 %v351, 0.0
      %v360 = vmax.f32 %v352, 0.0
      %v361 = vmax.f32 %v353, 0.0
      %v362 = vmax.f32 %v354, 0.0
      %v363 = vmax.f32 %v355, 0.0
      %v364 = vmax.f32 %v356, 0.0
      %v365 = vmax.f32 %v357, 0.0
      %v366 = vmax.f32 %v358, 0.0
      %v367 = vld [vmem:[%s3] sm:$0xff]
      %v368 = vld [vmem:[%s3 + $0x8] sm:$0xff]
      %v369 = vld [vmem:[%s3 + $0x10] sm:$0xff]
      %v370 = vld [vmem:[%s3 + $0x18] sm:$0xff]
      %vm371 = vcmask 523264
      %v373 = vsel %vm371, %v367, 0
      %v376 = vsel %vm371, %v368, 0
      %v379 = vsel %vm371, %v369, 0
      %v382 = vsel %vm371, %v370, 0
      %384 = vmatpush.msra.mxu0 0.0
      %385 = vmatpush.msra.mxu0 0.0
      %386 = vmatpush.msra.mxu0 0.0
      %387 = vmatpush.msra.mxu0 0.0
      %388 = vmatpush.msra.mxu0 0.0
      %389 = vmatpush.msra.mxu0 0.0
      %390 = vmatpush.msra.mxu0 0.0
      %391 = vmatpush.msra.mxu0 0.0
      %392 = vmatpush.msra.mxu0 %v366
      %393 = vmatpush.msra.mxu0 %v365
      %394 = vmatpush.msra.mxu0 %v364
      %395 = vmatpush.msra.mxu0 %v363
      %396 = vmatpush.msra.mxu0 %v362
      %397 = vmatpush.msra.mxu0 %v361
      %398 = vmatpush.msra.mxu0 %v360
      %399 = vmatpush.msra.mxu0 %v359
      %400 = vmatmul.f32.gmra.mxu0 %v373
      %v401 = vpop.f32.mrf.mxu0
      %v402 = vadd.f32 0.0, %v401
      %403 = vmatmul.f32.gmra.mxu0 %v376
      %v404 = vpop.f32.mrf.mxu0
      %v405 = vadd.f32 0.0, %v404
      %406 = vmatmul.f32.gmra.mxu0 %v379
      %v407 = vpop.f32.mrf.mxu0
      %v408 = vadd.f32 0.0, %v407
      %409 = vmatmul.f32.gmra.mxu0 %v382
      %v410 = vpop.f32.mrf.mxu0
      %v411 = vadd.f32 0.0, %v410
      %412 = vdwg.mxu0
      %vm413 = vcmask 130048
      %v414 = vsel %vm413, %v402, 0.0
      %415 = vadd.xlane.f32.xlu0 %v414
      %v416 = vpop.xlane.xlu0 %415
      %v417 = vsel %vm413, %v405, 0.0
      %418 = vadd.xlane.f32.xlu0 %v417
      %v419 = vpop.xlane.xlu0 %418
      %v420 = vsel %vm413, %v408, 0.0
      %421 = vadd.xlane.f32.xlu0 %v420
      %v422 = vpop.xlane.xlu0 %421
      %v423 = vsel %vm413, %v411, 0.0
      %424 = vadd.xlane.f32.xlu0 %v423
      %v425 = vpop.xlane.xlu0 %424
      %vm426 = vcmask 7168
      %427 = vst.msk [vmem:[%s230] sm:$0xff] %vm426, %v416
      %428 = vst.msk [vmem:[%s230 + $0x8] sm:$0xff] %vm426, %v419
      %429 = vst.msk [vmem:[%s230 + $0x10] sm:$0xff] %vm426, %v422
      %430 = vst.msk [vmem:[%s230 + $0x18] sm:$0xff] %vm426, %v425
      %v431 = vmul.f32 %v402, %v402
      %v432 = vmul.f32 %v405, %v405
      %v433 = vmul.f32 %v408, %v408
      %v434 = vmul.f32 %v411, %v411
      %v435 = vsel %vm413, %v431, 0.0
      %436 = vadd.xlane.f32.xlu0 %v435
      %v437 = vpop.xlane.xlu0 %436
      %v438 = vsel %vm413, %v432, 0.0
      %439 = vadd.xlane.f32.xlu0 %v438
      %v440 = vpop.xlane.xlu0 %439
      %v441 = vsel %vm413, %v433, 0.0
      %442 = vadd.xlane.f32.xlu0 %v441
      %v443 = vpop.xlane.xlu0 %442
      %v444 = vsel %vm413, %v434, 0.0
      %445 = vadd.xlane.f32.xlu0 %v444
      %v446 = vpop.xlane.xlu0 %445
      %vm447 = vcmask 15368
      %448 = vst.msk [vmem:[%s230] sm:$0xff] %vm447, %v437
      %449 = vst.msk [vmem:[%s230 + $0x8] sm:$0xff] %vm447, %v440
      %450 = vst.msk [vmem:[%s230 + $0x10] sm:$0xff] %vm447, %v443
      %451 = vst.msk [vmem:[%s230 + $0x18] sm:$0xff] %vm447, %v446
      %p452 = scmp.lt.s32.totalorder %s19, 1
      %s453 = scalar_select %p452, %s19, 1
      %p454 = scmp.lt.s32.totalorder %s20, 0
      %s455 = scalar_select %p454, %s20, 0
      %s456 = smul.addr %s455, 4
      %s457 = smul.addr %s453, 4
      %s458 = sadd.s32 %s456, %s457
      %s459 = smul.addr %s458, 8
      %s460 = scalar_lea.vmem %s4, %s459
      // Predicated region
      $region37: #{pointnet_block.6} parent=35 // pred_check
        %p461 = pneg %p138
      $region38: #{pointnet_block.6} parent=35 // pred_check_branch
        %463 = sbr.rel (%p461) target = $region40
      $region39: #{pointnet_block.6} parent=35 // pred_region
        _
      $region40: #{pointnet_block.6} parent=35 // pred_fallthru
        _
    $region36: #{pointnet_block.6} parent=5 // pred_fallthru
      _
    %p464 = scmp.le.s32.totalorder 2, %s10
    // Predicated region
    $region41: #{pointnet_block.6} parent=5 // pred_check
      %p465 = pneg %p464
    $region42: #{pointnet_block.6} parent=5 // pred_check_branch
      %467 = sbr.rel (%p465) target = $region44
    $region43: #{pointnet_block.6} parent=5 // pred_region
      %s468 = ssub.s32 %s10, 2
      // Predicated region
      $region45: #{pointnet_block.6} parent=43 // pred_check
        %p469 = pneg %p144
      $region46: #{pointnet_block.6} parent=43 // pred_check_branch
        %471 = sbr.rel (%p469) target = $region48
      $region47: #{pointnet_block.6} parent=43 // pred_region
        %p472 = scmp.lt.s32.totalorder %s21, 1
        %s473 = scalar_select %p472, %s21, 1
        %p474 = scmp.lt.s32.totalorder %s22, 0
        %s475 = scalar_select %p474, %s22, 0
        %s476 = smul.addr %s475, 4
        %s477 = smul.addr %s473, 4
        %s478 = sadd.s32 %s476, %s477
        %s479 = smul.addr %s478, 8
        %s480 = scalar_lea.vmem %s4, %s479
      $region48: #{pointnet_block.6} parent=43 // pred_fallthru
        _
    $region44: #{pointnet_block.6} parent=5 // pred_fallthru
      _
  $region6: #{pointnet_block.6} parent=0 // loop_footer
    %s14 = sadd.s32 1, %s10
  $region7: #{pointnet_block.6} parent=0 // loop_footer_branch
    %9 = sbr.rel target = $region3
  $region8: #{pointnet_block.6} parent=0 // loop_exit
    _

// kernel: pointnet_block.7
$region0: #{pointnet_block.7}
  #allocation0 [shape = 'u32[]', space=smem, size = 0x4, offset = 0x4, fixed_abs, tag = 'smem constant byte address 0x4 - core index']
  #allocation1 [shape = 'u32[72,128]{1,0:T(1,128)}', space=vmem, size = 0x9000, scoped, tag = 'internal scratch']
  %s0 = inlined_call_operand.vmem [shape: bf16[2,64,16], index: 0, kind: input, shape index: {}]
  %s1 = inlined_call_operand.vmem [shape: f32[64,1], index: 1, kind: input, shape index: {}]
  %s2 = inlined_call_operand.vmem [shape: f32[64,1], index: 2, kind: input, shape index: {}]
  %s3 = inlined_call_operand.vmem [shape: f32[32,64], index: 3, kind: input, shape index: {}]
  %s4 = inlined_call_operand.vmem [shape: f32[32,1], index: 4, kind: input, shape index: {}]
  %s5 = inlined_call_operand.vmem [shape: f32[32,1], index: 5, kind: input, shape index: {}]
  %s6 = inlined_call_operand.vmem [shape: f32[2,32,16], index: 6, kind: output, shape index: {}]
  %s7 = sld [smem:[#allocation0]]
  $region57: #{pointnet_block.7} parent=0
    _
  %s9 = ssub.s32 1, %s7
  %s10 = scalar_select 0, %s9, %s7
  loop: start=0, step=1, limit=4
  $region2: #{pointnet_block.7} parent=0 // loop_pre_header
    _
  $region3: #{pointnet_block.7} parent=0 // loop_header
    %s12 = sphi 0, %s16
    %p13 = scmp.ge.s32.totalorder %s12, 4
    %s19 = sphi 0, %s31
    %s20 = sphi 0, %s27
    %s21 = sphi 0, %s19
    %s22 = sphi 0, %s20
    %s23 = sphi 0, %s21
    %s24 = sphi 0, %s22
    %s36 = sphi 0, %s38
    %s39 = sphi 0, %s36
    %s40 = sphi 0, %s39
    %s56 = sphi 0, %s40
    %s60 = sphi 0, %s60
    %s62 = sphi 0, %s60
    %s63 = sphi 0, %s62
    %s77 = sphi 0, %s63
    %s81 = sphi 0, %s81
    %s83 = sphi 0, %s81
    %s84 = sphi 0, %s83
    %s98 = sphi 0, %s84
    %s102 = sphi 0, %s102
    %s104 = sphi 0, %s102
    %s105 = sphi 0, %s104
    %s119 = sphi 0, %s105
    %s123 = sphi 0, %s123
    %s125 = sphi 0, %s123
    %s126 = sphi 0, %s125
    %s140 = sphi 0, %s126
    %s144 = sphi 0, %s144
    %s146 = sphi 0, %s144
    %s147 = sphi 0, %s146
    %s161 = sphi 0, %s147
    %s169 = sphi 0, %s171
    %s172 = sphi 0, %s169
    %s173 = sphi 0, %s172
    %s189 = sphi 0, %s173
  $region4: #{pointnet_block.7} parent=0 // loop_header_branch
    %15 = sbr.rel (%p13) target = $region8
  $region5: #{pointnet_block.7} parent=0 // loop_body
    %s17 = ssub.s32 %s12, 1
    %s18 = ssub.s32 %s12, 2
    %s25 = sadd.s32 1, %s20
    %p26 = scmp.ge.s32.totalorder %s25, 1
    %s27 = scalar_select %p26, 0, %s25
    %s28 = sadd.s32 1, %s19
    %s29 = scalar_select %p26, %s28, %s19
    %p30 = scmp.ge.s32.totalorder %s29, 2
    %s31 = scalar_select %p30, 0, %s29
    %s32 = ssub.s32 %s19, %s31
    %s33 = ssub.s32 %s20, %s27
    %s34 = sor.u32 %s32, %s33
    %p35 = scmp.eq.s32.totalorder %s34, 0
    %s37 = sadd.s32 %s36, 1
    %s38 = scalar_select %p35, %s36, %s37
    %p41 = pneg %p35
    %p42 = scmp.eq.s32.totalorder %s12, 1
    %p43 = por %p41, %p42
    %p44 = scmp.ne.s32.totalorder %s36, %s39
    %p45 = scmp.eq.s32.totalorder %s12, 0
    %p46 = por %p44, %p45
    %p47 = scmp.ne.s32.totalorder %s36, %s39
    %p48 = scmp.eq.s32.totalorder %s17, 1
    %p49 = por %p47, %p48
    %p50 = scmp.ne.s32.totalorder %s39, %s40
    %p51 = scmp.eq.s32.totalorder %s17, 0
    %p52 = por %p50, %p51
    %p53 = scmp.ne.s32.totalorder %s39, %s40
    %p54 = scmp.eq.s32.totalorder %s18, 1
    %p55 = por %p53, %p54
    %p57 = scmp.ne.s32.totalorder %s40, %s56
    %p58 = scmp.eq.s32.totalorder %s18, 0
    %p59 = por %p57, %p58
    %s61 = sadd.s32 %s60, 1
    %p64 = scmp.eq.s32.totalorder %s12, 1
    %p65 = scmp.ne.s32.totalorder %s60, %s62
    %p66 = scmp.eq.s32.totalorder %s12, 0
    %p67 = por %p65, %p66
    %p68 = scmp.ne.s32.totalorder %s60, %s62
    %p69 = scmp.eq.s32.totalorder %s17, 1
    %p70 = por %p68, %p69
    %p71 = scmp.ne.s32.totalorder %s62, %s63
    %p72 = scmp.eq.s32.totalorder %s17, 0
    %p73 = por %p71, %p72
    %p74 = scmp.ne.s32.totalorder %s62, %s63
    %p75 = scmp.eq.s32.totalorder %s18, 1
    %p76 = por %p74, %p75
    %p78 = scmp.ne.s32.totalorder %s63, %s77
    %p79 = scmp.eq.s32.totalorder %s18, 0
    %p80 = por %p78, %p79
    %s82 = sadd.s32 %s81, 1
    %p85 = scmp.eq.s32.totalorder %s12, 1
    %p86 = scmp.ne.s32.totalorder %s81, %s83
    %p87 = scmp.eq.s32.totalorder %s12, 0
    %p88 = por %p86, %p87
    %p89 = scmp.ne.s32.totalorder %s81, %s83
    %p90 = scmp.eq.s32.totalorder %s17, 1
    %p91 = por %p89, %p90
    %p92 = scmp.ne.s32.totalorder %s83, %s84
    %p93 = scmp.eq.s32.totalorder %s17, 0
    %p94 = por %p92, %p93
    %p95 = scmp.ne.s32.totalorder %s83, %s84
    %p96 = scmp.eq.s32.totalorder %s18, 1
    %p97 = por %p95, %p96
    %p99 = scmp.ne.s32.totalorder %s84, %s98
    %p100 = scmp.eq.s32.totalorder %s18, 0
    %p101 = por %p99, %p100
    %s103 = sadd.s32 %s102, 1
    %p106 = scmp.eq.s32.totalorder %s12, 1
    %p107 = scmp.ne.s32.totalorder %s102, %s104
    %p108 = scmp.eq.s32.totalorder %s12, 0
    %p109 = por %p107, %p108
    %p110 = scmp.ne.s32.totalorder %s102, %s104
    %p111 = scmp.eq.s32.totalorder %s17, 1
    %p112 = por %p110, %p111
    %p113 = scmp.ne.s32.totalorder %s104, %s105
    %p114 = scmp.eq.s32.totalorder %s17, 0
    %p115 = por %p113, %p114
    %p116 = scmp.ne.s32.totalorder %s104, %s105
    %p117 = scmp.eq.s32.totalorder %s18, 1
    %p118 = por %p116, %p117
    %p120 = scmp.ne.s32.totalorder %s105, %s119
    %p121 = scmp.eq.s32.totalorder %s18, 0
    %p122 = por %p120, %p121
    %s124 = sadd.s32 %s123, 1
    %p127 = scmp.eq.s32.totalorder %s12, 1
    %p128 = scmp.ne.s32.totalorder %s123, %s125
    %p129 = scmp.eq.s32.totalorder %s12, 0
    %p130 = por %p128, %p129
    %p131 = scmp.ne.s32.totalorder %s123, %s125
    %p132 = scmp.eq.s32.totalorder %s17, 1
    %p133 = por %p131, %p132
    %p134 = scmp.ne.s32.totalorder %s125, %s126
    %p135 = scmp.eq.s32.totalorder %s17, 0
    %p136 = por %p134, %p135
    %p137 = scmp.ne.s32.totalorder %s125, %s126
    %p138 = scmp.eq.s32.totalorder %s18, 1
    %p139 = por %p137, %p138
    %p141 = scmp.ne.s32.totalorder %s126, %s140
    %p142 = scmp.eq.s32.totalorder %s18, 0
    %p143 = por %p141, %p142
    %s145 = sadd.s32 %s144, 1
    %p148 = scmp.eq.s32.totalorder %s12, 1
    %p149 = scmp.ne.s32.totalorder %s144, %s146
    %p150 = scmp.eq.s32.totalorder %s12, 0
    %p151 = por %p149, %p150
    %p152 = scmp.ne.s32.totalorder %s144, %s146
    %p153 = scmp.eq.s32.totalorder %s17, 1
    %p154 = por %p152, %p153
    %p155 = scmp.ne.s32.totalorder %s146, %s147
    %p156 = scmp.eq.s32.totalorder %s17, 0
    %p157 = por %p155, %p156
    %p158 = scmp.ne.s32.totalorder %s146, %s147
    %p159 = scmp.eq.s32.totalorder %s18, 1
    %p160 = por %p158, %p159
    %p162 = scmp.ne.s32.totalorder %s147, %s161
    %p163 = scmp.eq.s32.totalorder %s18, 0
    %p164 = por %p162, %p163
    %s165 = ssub.s32 %s19, %s31
    %s166 = ssub.s32 %s20, %s27
    %s167 = sor.u32 %s165, %s166
    %p168 = scmp.eq.s32.totalorder %s167, 0
    %s170 = sadd.s32 %s169, 1
    %s171 = scalar_select %p168, %s169, %s170
    %p174 = pneg %p168
    %p175 = scmp.eq.s32.totalorder %s12, 1
    %p176 = por %p174, %p175
    %p177 = scmp.ne.s32.totalorder %s169, %s172
    %p178 = scmp.eq.s32.totalorder %s12, 0
    %p179 = por %p177, %p178
    %p180 = scmp.ne.s32.totalorder %s169, %s172
    %p181 = scmp.eq.s32.totalorder %s17, 1
    %p182 = por %p180, %p181
    %p183 = scmp.ne.s32.totalorder %s172, %s173
    %p184 = scmp.eq.s32.totalorder %s17, 0
    %p185 = por %p183, %p184
    %p186 = scmp.ne.s32.totalorder %s172, %s173
    %p187 = scmp.eq.s32.totalorder %s18, 1
    %p188 = por %p186, %p187
    %p190 = scmp.ne.s32.totalorder %s173, %s189
    %p191 = scmp.eq.s32.totalorder %s18, 0
    %p192 = por %p190, %p191
    %p193 = scmp.le.s32.totalorder 1, %s12
    %p194 = scmp.lt.s32.totalorder %s12, 3
    %p195 = pnand %p193, %p194
    %p196 = pneg %p195
    // Predicated region
    $region9: #{pointnet_block.7} parent=5 // pred_check
      _
    $region10: #{pointnet_block.7} parent=5 // pred_check_branch
      %198 = sbr.rel (%p195) target = $region12
    $region11: #{pointnet_block.7} parent=5 // pred_region
      %s199 = ssub.s32 %s12, 1
      // Predicated region
      $region13: #{pointnet_block.7} parent=11 // pred_check
        %p200 = pneg %p73
      $region14: #{pointnet_block.7} parent=11 // pred_check_branch
        %202 = sbr.rel (%p200) target = $region16
      $region15: #{pointnet_block.7} parent=11 // pred_region
        _
      $region16: #{pointnet_block.7} parent=11 // pred_fallthru
        _
      // Predicated region
      $region17: #{pointnet_block.7} parent=11 // pred_check
        %p203 = pneg %p94
      $region18: #{pointnet_block.7} parent=11 // pred_check_branch
        %205 = sbr.rel (%p203) target = $region20
      $region19: #{pointnet_block.7} parent=11 // pred_region
        _
      $region20: #{pointnet_block.7} parent=11 // pred_fallthru
        _
      // Predicated region
      $region21: #{pointnet_block.7} parent=11 // pred_check
        %p206 = pneg %p115
      $region22: #{pointnet_block.7} parent=11 // pred_check_branch
        %208 = sbr.rel (%p206) target = $region24
      $region23: #{pointnet_block.7} parent=11 // pred_region
        _
      $region24: #{pointnet_block.7} parent=11 // pred_fallthru
        _
      // Predicated region
      $region25: #{pointnet_block.7} parent=11 // pred_check
        %p209 = pneg %p136
      $region26: #{pointnet_block.7} parent=11 // pred_check_branch
        %211 = sbr.rel (%p209) target = $region28
      $region27: #{pointnet_block.7} parent=11 // pred_region
        _
      $region28: #{pointnet_block.7} parent=11 // pred_fallthru
        _
      // Predicated region
      $region29: #{pointnet_block.7} parent=11 // pred_check
        %p212 = pneg %p157
      $region30: #{pointnet_block.7} parent=11 // pred_check_branch
        %214 = sbr.rel (%p212) target = $region32
      $region31: #{pointnet_block.7} parent=11 // pred_region
        _
      $region32: #{pointnet_block.7} parent=11 // pred_fallthru
        _
    $region12: #{pointnet_block.7} parent=5 // pred_fallthru
      _
    %p215 = scmp.lt.s32.totalorder %s12, 2
    // Predicated region
    $region33: #{pointnet_block.7} parent=5 // pred_check
      %p216 = pneg %p215
    $region34: #{pointnet_block.7} parent=5 // pred_check_branch
      %218 = sbr.rel (%p216) target = $region36
    $region35: #{pointnet_block.7} parent=5 // pred_region
      // Predicated region
      $region37: #{pointnet_block.7} parent=35 // pred_check
        %p219 = pneg %p46
      $region38: #{pointnet_block.7} parent=35 // pred_check_branch
        %221 = sbr.rel (%p219) target = $region40
      $region39: #{pointnet_block.7} parent=35 // pred_region
        %p222 = scmp.lt.s32.totalorder %s19, 1
        %s223 = scalar_select %p222, %s19, 1
        %p224 = scmp.lt.s32.totalorder %s20, 0
        %s225 = scalar_select %p224, %s20, 0
        %s226 = smul.addr %s223, 8
        %s227 = sadd.s32 %s225, %s226
        %s228 = smul.addr %s227, 4
        %s229 = scalar_lea.vmem %s0, %s228
      $region40: #{pointnet_block.7} parent=35 // pred_fallthru
        _
    $region36: #{pointnet_block.7} parent=5 // pred_fallthru
      _
    %p230 = scmp.le.s32.totalorder 1, %s12
    %p231 = scmp.lt.s32.totalorder %s12, 3
    %p232 = pnand %p230, %p231
    %p233 = pneg %p232
    // Predicated region
    $region41: #{pointnet_block.7} parent=5 // pred_check
      _
    $region42: #{pointnet_block.7} parent=5 // pred_check_branch
      %235 = sbr.rel (%p232) target = $region44
    $region43: #{pointnet_block.7} parent=5 // pred_region
      %s236 = ssub.s32 %s12, 1
      %p237 = scmp.lt.s32.totalorder %s21, 1
      %s238 = scalar_select %p237, %s21, 1
      %p239 = scmp.lt.s32.totalorder %s22, 0
      %s240 = scalar_select %p239, %s22, 0
      %s241 = smul.addr %s238, 8
      %s242 = sadd.s32 %s240, %s241
      %s243 = smul.addr %s242, 4
      %s244 = scalar_lea.vmem %s0, %s243
      %p245 = pneg %p52
      %p246 = pneg %p49
      %p247 = pneg %p73
      %p248 = pneg %p70
      %p249 = pneg %p94
      %p250 = pneg %p91
      %p251 = pneg %p115
      %p252 = pneg %p112
      %p253 = pneg %p136
      %p254 = pneg %p133
      %p255 = pneg %p157
      %p256 = pneg %p154
      %p257 = pneg %p185
      %p258 = pneg %p182
      %p259 = scmp.lt.s32.totalorder %s21, 1
      %s260 = scalar_select %p259, %s21, 1
      %p261 = scmp.lt.s32.totalorder %s22, 0
      %s262 = scalar_select %p261, %s22, 0
      %s263 = smul.addr %s260, 4
      %s264 = sadd.s32 %s262, %s263
      %s265 = smul.addr %s264, 8
      %s266 = scalar_lea.vmem %s6, %s265
      %p267 = scmp.lt.s32.totalorder %s21, 1
      %s268 = scalar_select %p267, %s21, 1
      %p269 = scmp.lt.s32.totalorder %s22, 0
      %s270 = scalar_select %p269, %s22, 0
      %s271 = smul.addr %s268, 8
      %s272 = sadd.s32 %s270, %s271
      %s273 = smul.addr %s272, 4
      %s274 = scalar_lea.vmem %s0, %s273
      %p275 = scmp.lt.s32.totalorder %s21, 1
      %s276 = scalar_select %p275, %s21, 1
      %p277 = scmp.lt.s32.totalorder %s22, 0
      %s278 = scalar_select %p277, %s22, 0
      %s279 = smul.addr %s276, 4
      %s280 = sadd.s32 %s278, %s279
      %s281 = smul.addr %s280, 8
      %s282 = scalar_lea.vmem %s6, %s281
      %v283 = vld [vmem:[%s274] sm:$0xf]
      %v284 = vld [vmem:[%s274 + $0x4] sm:$0xf]
      %v285 = vld [vmem:[%s274 + $0x8] sm:$0xf]
      %v286 = vld [vmem:[%s274 + $0xc] sm:$0xf]
      %v287 = vld [vmem:[%s274 + $0x10] sm:$0xf]
      %v288 = vld [vmem:[%s274 + $0x14] sm:$0xf]
      %v289 = vld [vmem:[%s274 + $0x18] sm:$0xf]
      %v290 = vld [vmem:[%s274 + $0x1c] sm:$0xf]
      %v291 = vunpack.c.l.bf16 %v283
      %v292 = vunpack.c.l.bf16 %v284
      %v293 = vunpack.c.l.bf16 %v285
      %v294 = vunpack.c.l.bf16 %v286
      %v295 = vunpack.c.l.bf16 %v287
      %v296 = vunpack.c.l.bf16 %v288
      %v297 = vunpack.c.l.bf16 %v289
      %v298 = vunpack.c.l.bf16 %v290
      %v299 = vld [vmem:[%s1] sm:$0xff]
      %v300 = vld [vmem:[%s1 + $0x8] sm:$0xff]
      %v301 = vld [vmem:[%s1 + $0x10] sm:$0xff]
      %v302 = vld [vmem:[%s1 + $0x18] sm:$0xff]
      %v303 = vld [vmem:[%s1 + $0x20] sm:$0xff]
      %v304 = vld [vmem:[%s1 + $0x28] sm:$0xff]
      %v305 = vld [vmem:[%s1 + $0x30] sm:$0xff]
      %v306 = vld [vmem:[%s1 + $0x38] sm:$0xff]
      %308 = vset.pattern.permute.xlu0 0
      %309 = vperm.xlu0 %308, %v299
      %v310 = vpop.permute.xlu0 %309
      %313 = vset.pattern.permute.xlu0 0
      %314 = vperm.xlu0 %313, %v300
      %v315 = vpop.permute.xlu0 %314
      %318 = vset.pattern.permute.xlu0 0
      %319 = vperm.xlu0 %318, %v301
      %v320 = vpop.permute.xlu0 %319
      %323 = vset.pattern.permute.xlu0 0
      %324 = vperm.xlu0 %323, %v302
      %v325 = vpop.permute.xlu0 %324
      %328 = vset.pattern.permute.xlu0 0
      %329 = vperm.xlu0 %328, %v303
      %v330 = vpop.permute.xlu0 %329
      %333 = vset.pattern.permute.xlu0 0
      %334 = vperm.xlu0 %333, %v304
      %v335 = vpop.permute.xlu0 %334
      %338 = vset.pattern.permute.xlu0 0
      %339 = vperm.xlu0 %338, %v305
      %v340 = vpop.permute.xlu0 %339
      %343 = vset.pattern.permute.xlu0 0
      %344 = vperm.xlu0 %343, %v306
      %v345 = vpop.permute.xlu0 %344
      %v347 = vmul.f32 %v291, %v310
      %v348 = vmul.f32 %v292, %v315
      %v349 = vmul.f32 %v293, %v320
      %v350 = vmul.f32 %v294, %v325
      %v351 = vmul.f32 %v295, %v330
      %v352 = vmul.f32 %v296, %v335
      %v353 = vmul.f32 %v297, %v340
      %v354 = vmul.f32 %v298, %v345
      %v355 = vld [vmem:[%s2] sm:$0xff]
      %v356 = vld [vmem:[%s2 + $0x8] sm:$0xff]
      %v357 = vld [vmem:[%s2 + $0x10] sm:$0xff]
      %v358 = vld [vmem:[%s2 + $0x18] sm:$0xff]
      %v359 = vld [vmem:[%s2 + $0x20] sm:$0xff]
      %v360 = vld [vmem:[%s2 + $0x28] sm:$0xff]
      %v361 = vld [vmem:[%s2 + $0x30] sm:$0xff]
      %v362 = vld [vmem:[%s2 + $0x38] sm:$0xff]
      %364 = vset.pattern.permute.xlu0 0
      %365 = vperm.xlu0 %364, %v355
      %v366 = vpop.permute.xlu0 %365
      %369 = vset.pattern.permute.xlu0 0
      %370 = vperm.xlu0 %369, %v356
      %v371 = vpop.permute.xlu0 %370
      %374 = vset.pattern.permute.xlu0 0
      %375 = vperm.xlu0 %374, %v357
      %v376 = vpop.permute.xlu0 %375
      %379 = vset.pattern.permute.xlu0 0
      %380 = vperm.xlu0 %379, %v358
      %v381 = vpop.permute.xlu0 %380
      %384 = vset.pattern.permute.xlu0 0
      %385 = vperm.xlu0 %384, %v359
      %v386 = vpop.permute.xlu0 %385
      %389 = vset.pattern.permute.xlu0 0
      %390 = vperm.xlu0 %389, %v360
      %v391 = vpop.permute.xlu0 %390
      %394 = vset.pattern.permute.xlu0 0
      %395 = vperm.xlu0 %394, %v361
      %v396 = vpop.permute.xlu0 %395
      %399 = vset.pattern.permute.xlu0 0
      %400 = vperm.xlu0 %399, %v362
      %v401 = vpop.permute.xlu0 %400
      %v403 = vadd.f32 %v347, %v366
      %v404 = vadd.f32 %v348, %v371
      %v405 = vadd.f32 %v349, %v376
      %v406 = vadd.f32 %v350, %v381
      %v407 = vadd.f32 %v351, %v386
      %v408 = vadd.f32 %v352, %v391
      %v409 = vadd.f32 %v353, %v396
      %v410 = vadd.f32 %v354, %v401
      %v411 = vmax.f32 %v403, 0.0
      %v412 = vmax.f32 %v404, 0.0
      %v413 = vmax.f32 %v405, 0.0
      %v414 = vmax.f32 %v406, 0.0
      %v415 = vmax.f32 %v407, 0.0
      %v416 = vmax.f32 %v408, 0.0
      %v417 = vmax.f32 %v409, 0.0
      %v418 = vmax.f32 %v410, 0.0
      %v419 = vld [vmem:[%s3] sm:$0xff]
      %v420 = vld [vmem:[%s3 + $0x8] sm:$0xff]
      %v421 = vld [vmem:[%s3 + $0x10] sm:$0xff]
      %v422 = vld [vmem:[%s3 + $0x18] sm:$0xff]
      %vm423 = vcmask 523264
      %v425 = vsel %vm423, %v419, 0
      %v428 = vsel %vm423, %v420, 0
      %v431 = vsel %vm423, %v421, 0
      %v434 = vsel %vm423, %v422, 0
      %436 = vmatpush.msra.mxu0 0.0
      %437 = vmatpush.msra.mxu0 0.0
      %438 = vmatpush.msra.mxu0 0.0
      %439 = vmatpush.msra.mxu0 0.0
      %440 = vmatpush.msra.mxu0 0.0
      %441 = vmatpush.msra.mxu0 0.0
      %442 = vmatpush.msra.mxu0 0.0
      %443 = vmatpush.msra.mxu0 0.0
      %444 = vmatpush.msra.mxu0 %v418
      %445 = vmatpush.msra.mxu0 %v417
      %446 = vmatpush.msra.mxu0 %v416
      %447 = vmatpush.msra.mxu0 %v415
      %448 = vmatpush.msra.mxu0 %v414
      %449 = vmatpush.msra.mxu0 %v413
      %450 = vmatpush.msra.mxu0 %v412
      %451 = vmatpush.msra.mxu0 %v411
      %452 = vmatmul.f32.gmra.mxu0 %v425
      %v453 = vpop.f32.mrf.mxu0
      %v454 = vadd.f32 0.0, %v453
      %455 = vmatmul.f32.gmra.mxu0 %v428
      %v456 = vpop.f32.mrf.mxu0
      %v457 = vadd.f32 0.0, %v456
      %458 = vmatmul.f32.gmra.mxu0 %v431
      %v459 = vpop.f32.mrf.mxu0
      %v460 = vadd.f32 0.0, %v459
      %461 = vmatmul.f32.gmra.mxu0 %v434
      %v462 = vpop.f32.mrf.mxu0
      %v463 = vadd.f32 0.0, %v462
      %464 = vdwg.mxu0
      %v465 = vld [vmem:[%s4] sm:$0xff]
      %v466 = vld [vmem:[%s4 + $0x8] sm:$0xff]
      %v467 = vld [vmem:[%s4 + $0x10] sm:$0xff]
      %v468 = vld [vmem:[%s4 + $0x18] sm:$0xff]
      %470 = vset.pattern.permute.xlu0 0
      %471 = vperm.xlu0 %470, %v465
      %v472 = vpop.permute.xlu0 %471
      %475 = vset.pattern.permute.xlu0 0
      %476 = vperm.xlu0 %475, %v466
      %v477 = vpop.permute.xlu0 %476
      %480 = vset.pattern.permute.xlu0 0
      %481 = vperm.xlu0 %480, %v467
      %v482 = vpop.permute.xlu0 %481
      %485 = vset.pattern.permute.xlu0 0
      %486 = vperm.xlu0 %485, %v468
      %v487 = vpop.permute.xlu0 %486
      %v489 = vmul.f32 %v454, %v472
      %v490 = vmul.f32 %v457, %v477
      %v491 = vmul.f32 %v460, %v482
      %v492 = vmul.f32 %v463, %v487
      %v493 = vld [vmem:[%s5] sm:$0xff]
      %v494 = vld [vmem:[%s5 + $0x8] sm:$0xff]
      %v495 = vld [vmem:[%s5 + $0x10] sm:$0xff]
      %v496 = vld [vmem:[%s5 + $0x18] sm:$0xff]
      %498 = vset.pattern.permute.xlu0 0
      %499 = vperm.xlu0 %498, %v493
      %v500 = vpop.permute.xlu0 %499
      %503 = vset.pattern.permute.xlu0 0
      %504 = vperm.xlu0 %503, %v494
      %v505 = vpop.permute.xlu0 %504
      %508 = vset.pattern.permute.xlu0 0
      %509 = vperm.xlu0 %508, %v495
      %v510 = vpop.permute.xlu0 %509
      %513 = vset.pattern.permute.xlu0 0
      %514 = vperm.xlu0 %513, %v496
      %v515 = vpop.permute.xlu0 %514
      %v517 = vadd.f32 %v489, %v500
      %v518 = vadd.f32 %v490, %v505
      %v519 = vadd.f32 %v491, %v510
      %v520 = vadd.f32 %v492, %v515
      %v521 = vmax.f32 %v517, 0.0
      %v522 = vmax.f32 %v518, 0.0
      %v523 = vmax.f32 %v519, 0.0
      %v524 = vmax.f32 %v520, 0.0
      %vm525 = vcmask 130048
      %526 = vst.msk [vmem:[%s282] sm:$0xff] %vm525, %v521
      %527 = vst.msk [vmem:[%s282 + $0x8] sm:$0xff] %vm525, %v522
      %528 = vst.msk [vmem:[%s282 + $0x10] sm:$0xff] %vm525, %v523
      %529 = vst.msk [vmem:[%s282 + $0x18] sm:$0xff] %vm525, %v524
      %p530 = scmp.lt.s32.totalorder %s21, 1
      %s531 = scalar_select %p530, %s21, 1
      %p532 = scmp.lt.s32.totalorder %s22, 0
      %s533 = scalar_select %p532, %s22, 0
      %s534 = smul.addr %s531, 4
      %s535 = sadd.s32 %s533, %s534
      %s536 = smul.addr %s535, 8
      %s537 = scalar_lea.vmem %s6, %s536
      // Predicated region
      $region45: #{pointnet_block.7} parent=43 // pred_check
        %p538 = pneg %p182
      $region46: #{pointnet_block.7} parent=43 // pred_check_branch
        %540 = sbr.rel (%p538) target = $region48
      $region47: #{pointnet_block.7} parent=43 // pred_region
        _
      $region48: #{pointnet_block.7} parent=43 // pred_fallthru
        _
    $region44: #{pointnet_block.7} parent=5 // pred_fallthru
      _
    %p541 = scmp.le.s32.totalorder 2, %s12
    // Predicated region
    $region49: #{pointnet_block.7} parent=5 // pred_check
      %p542 = pneg %p541
    $region50: #{pointnet_block.7} parent=5 // pred_check_branch
      %544 = sbr.rel (%p542) target = $region52
    $region51: #{pointnet_block.7} parent=5 // pred_region
      %s545 = ssub.s32 %s12, 2
      // Predicated region
      $region53: #{pointnet_block.7} parent=51 // pred_check
        %p546 = pneg %p188
      $region54: #{pointnet_block.7} parent=51 // pred_check_branch
        %548 = sbr.rel (%p546) target = $region56
      $region55: #{pointnet_block.7} parent=51 // pred_region
        %p549 = scmp.lt.s32.totalorder %s23, 1
        %s550 = scalar_select %p549, %s23, 1
        %p551 = scmp.lt.s32.totalorder %s24, 0
        %s552 = scalar_select %p551, %s24, 0
        %s553 = smul.addr %s550, 4
        %s554 = sadd.s32 %s552, %s553
        %s555 = smul.addr %s554, 8
        %s556 = scalar_lea.vmem %s6, %s555
      $region56: #{pointnet_block.7} parent=51 // pred_fallthru
        _
    $region52: #{pointnet_block.7} parent=5 // pred_fallthru
      _
  $region6: #{pointnet_block.7} parent=0 // loop_footer
    %s16 = sadd.s32 1, %s12
  $region7: #{pointnet_block.7} parent=0 // loop_footer_branch
    %11 = sbr.rel target = $region3
  $region8: #{pointnet_block.7} parent=0 // loop_exit
    _

</llo_original>
